<compile_context>
chip_gen: v5e
topology: v5e:2x2
jax: 0.10.0
libtpu: 0.0.40
codegen_flags: <defaults>
</compile_context>

<pallas_src>
import functools
import math

import jax
import jax.numpy as jnp
from jax import lax
from jax.experimental import pallas as pl
from jax.experimental.pallas import tpu as pltpu


# ----------------------------------------------------------------------------
# Fused Pallas kernel: all conv blocks, activations resident on-chip
# ----------------------------------------------------------------------------
def _fused_encoder_kernel(*refs, meta, nb, negative_slope):
    """refs = [x_ref, (M_all, b_row) * L, o_ref, pad_scratch * (L-1)].

    x_ref        : (nb * hp0, W0*Cin0_pad)  row-padded, channel-padded input slab
    M_all refs   : (K*W*Cin, Wo*Cout)       bf16 width-Toeplitz weights, taps stacked
    b_row refs   : (1, Wo*Cout)             f32 bias row
    o_ref        : (nb * Ho_last, Wo_last*Cout_last)
    pad scratches: (nb * (Ho_prev + 2*p), Wo_prev*Cout_prev) f32, 'same'-row-padded
                   activations for the next layer.
    """
    n_layers = len(meta)
    x_ref = refs[0]
    w_refs = refs[1:1 + 2 * n_layers]
    o_ref = refs[1 + 2 * n_layers]
    pad_refs = refs[2 + 2 * n_layers:]

    src = x_ref                                  # current (padded) layer input ref
    for li, m in enumerate(meta):
        k, s, ho, hp = m["k"], m["stride"], m["ho"], m["hp"]
        m_ref = w_refs[2 * li]
        b_ref = w_refs[2 * li + 1]

        # Build rows_all = (nb*Ho, K*W*Cin): per image, each vertical tap is a
        # (strided) sublane slice of the padded slab; taps concatenate along lanes
        # (every stripe is a 128 multiple), images concatenate along sublanes.
        img_rows = []
        for n in range(nb):
            base = n * hp
            taps = []
            for kh in range(k):
                if s > 1:
                    sl = pl.ds(base + kh, ho, stride=s)
                else:
                    sl = pl.ds(base + kh, ho)
                taps.append(src[sl, :])
            img_rows.append(taps[0] if k == 1 else jnp.concatenate(taps, axis=-1))
        rows_all = img_rows[0] if nb == 1 else jnp.concatenate(img_rows, axis=0)

        # One bf16 MXU dot per layer; accumulate in f32.
        acc = jnp.dot(rows_all.astype(jnp.bfloat16), m_ref[...],
                      preferred_element_type=jnp.float32)
        # Epilogue stays in f32 (v5e has no bf16 VPU).
        acc = acc + b_ref[...]
        if m["act"]:
            acc = jnp.where(acc >= 0, acc, negative_slope * acc)

        if li + 1 < n_layers:
            nxt = meta[li + 1]
            p_n, hp_n = nxt["pad"], nxt["hp"]
            dst = pad_refs[li]
            zrow = jnp.zeros((p_n, acc.shape[-1]), jnp.float32)
            for n in range(nb):
                img = acc if nb == 1 else acc[n * ho:(n + 1) * ho, :]
                slab = img if p_n == 0 else jnp.concatenate([zrow, img, zrow], axis=0)
                dst[pl.ds(n * hp_n, hp_n), :] = slab
            src = dst
        else:
            o_ref[...] = acc.astype(o_ref.dtype)   # lane- and sublane-dense store


def _const_index_map(ndim):
    def index_map(g):
        return (0,) * ndim
    return index_map


# ----------------------------------------------------------------------------
# Parameter construction (deterministic, synthetic)
# ----------------------------------------------------------------------------
def init_vanilla_encoder_params(key, *, in_channels, num_downsample,
                                latent_channels, kernel_size=3,
                                first_kernel_size=7):
    start_channels = int(round(latent_channels / 2 ** num_downsample))
    assert start_channels > 0

    cfgs = [dict(cin=in_channels, cout=start_channels, k=first_kernel_size,
                 s=1, norm=True, act=True)]
    in_nc = start_channels
    for i in range(num_downsample):
        is_last = i == num_downsample - 1
        if not is_last:
            out_nc = min(in_nc * 2, latent_channels)
            norm, act = True, True
        else:
            out_nc = latent_channels
            norm, act = False, False          # num_residual_blocks == 0
        cfgs.append(dict(cin=in_nc, cout=out_nc, k=kernel_size, s=2,
                         norm=norm, act=act))
        in_nc = out_nc

    params = []
    keys = jax.random.split(key, 6 * len(cfgs))
    ki = 0
    for cfg in cfgs:
        k, cin, cout = cfg["k"], cfg["cin"], cfg["cout"]
        fan_in = k * k * cin
        wgt = jax.random.normal(keys[ki], (k, k, cin, cout),
                                jnp.float32) / math.sqrt(float(fan_in))
        bias = 0.01 * jax.random.normal(keys[ki + 1], (cout,), jnp.float32)
        bn = None
        if cfg["norm"]:
            # Non-trivial running stats so BN folding is genuinely validated
            # against the unfolded reference below.
            bn = dict(
                gamma=1.0 + 0.05 * jax.random.normal(keys[ki + 2], (cout,), jnp.float32),
                beta=0.05 * jax.random.normal(keys[ki + 3], (cout,), jnp.float32),
                mean=0.1 * jax.random.normal(keys[ki + 4], (cout,), jnp.float32),
                var=1.0 + 0.1 * jnp.abs(jax.random.normal(keys[ki + 5], (cout,), jnp.float32)),
                eps=1e-5)
        params.append(dict(w=wgt, b=bias, stride=cfg["s"], act=cfg["act"], bn=bn))
        ki += 6
    return params


def fold_batchnorm(params):
    """Fold inference-mode BatchNorm into conv weight/bias."""
    folded = []
    for layer in params:
        w, b = layer["w"], layer["b"]
        bn = layer.get("bn")
        if bn is not None:
            scale = bn["gamma"] / jnp.sqrt(bn["var"] + bn["eps"])
            w = w * scale.reshape(1, 1, 1, -1)
            b = (b - bn["mean"]) * scale + bn["beta"]
        folded.append(dict(w=w, b=b, stride=layer["stride"], act=layer["act"]))
    return folded


def prepare_fused_layers(folded, height, width, *, images_per_step=1,
                         negative_slope=0.2):
    """Expand folded HWIO conv weights into tap-stacked width-Toeplitz matrices."""
    layers, meta = [], []
    h, w = height, width
    for li, layer in enumerate(folded):
        w_hwio, bias, stride = layer["w"], layer["b"], layer["stride"]
        k, _, cin, cout = w_hwio.shape
        p = (k - 1) // 2
        ho = (h + 2 * p - k) // stride + 1
        wo = (w + 2 * p - k) // stride + 1

        # Layer-0 only: zero-pad Cin so each tap stripe (W*Cin lanes) is a
        # multiple of 128 -> 128-aligned lane concats, unmasked stores.
        cin_pad = cin
        if li == 0:
            for cand in range(cin, cin + 129):
                if (w * cand) % 128 == 0:
                    cin_pad = cand
                    break
            if cin_pad != cin:
                w_hwio = jnp.pad(w_hwio, ((0, 0), (0, 0), (0, cin_pad - cin), (0, 0)))

        # Width-Toeplitz (horizontal taps + stride + 'same' col padding), with
        # all K height-taps stacked along the contraction axis.
        kw = jnp.arange(w)[:, None] - jnp.arange(wo)[None, :] * stride + p   # (W, Wo)
        valid = (kw >= 0) & (kw < k)
        g = w_hwio[:, jnp.clip(kw, 0, k - 1), :, :]          # (K, W, Wo, Cin, Cout)
        g = g * valid[None, :, :, None, None].astype(w_hwio.dtype)
        m_all = jnp.transpose(g, (0, 1, 3, 2, 4)).reshape(k * w * cin_pad, wo * cout)

        b_row = jnp.tile(bias, wo).reshape(1, wo * cout).astype(jnp.float32)

        hp = h + 2 * p
        if li == 0:
            hp = -(-hp // 8) * 8     # sublane-align the HBM input block pitch

        layers.append(dict(M=m_all.astype(jnp.bfloat16), b_row=b_row))
        meta.append(dict(k=k, stride=stride, pad=p, ho=ho, hp=hp,
                         wc_in=w * cin_pad, wc_out=wo * cout, act=layer["act"]))
        h, w = ho, wo

    weight_bytes = sum(int(l["M"].size) * l["M"].dtype.itemsize
                       + int(l["b_row"].size) * 4 for l in layers)
    # VMEM guard (see TODO at top): bail out loudly instead of spilling/OOM-ing.
    assert weight_bytes < 24 * 1024 * 1024, (
        f"Toeplitz weights ({weight_bytes} B) too large for single-shot VMEM; "
        "add Wo tiling before scaling image size.")

    return dict(layers=layers, meta=meta, images_per_step=images_per_step,
                negative_slope=negative_slope,
                cin_pad0=int(meta[0]["wc_in"] // width),
                out_ho=meta[-1]["ho"], out_wo=w,
                out_cout=int(folded[-1]["w"].shape[-1]))


# ----------------------------------------------------------------------------
# Encoder forward (NCHW in / NCHW out, matching PyTorch semantics)
# ----------------------------------------------------------------------------
def vanilla_encoder_forward(fused, x_nchw):
    meta = fused["meta"]
    nb = fused["images_per_step"]
    neg = fused["negative_slope"]
    n, c, h, w = x_nchw.shape

    m0 = meta[0]
    p0, hp0, wc0 = m0["pad"], m0["hp"], m0["wc_in"]
    cin_pad = fused["cin_pad0"]

    # NCHW -> NHWC, 'same' zero rows (+ alignment rows), zero channel pad,
    # then flatten (W, C) into lanes: (N, hp0, W*Cin_pad), f32.
    x = jnp.transpose(x_nchw, (0, 2, 3, 1)).astype(jnp.float32)
    x = jnp.pad(x, ((0, 0), (p0, hp0 - h - p0), (0, 0), (0, cin_pad - c)))
    x2d = x.reshape(n, hp0, wc0)

    n_steps = pl.cdiv(n, nb)
    n_pad = n_steps * nb
    if n_pad != n:
        x2d = jnp.pad(x2d, ((0, n_pad - n), (0, 0), (0, 0)))
    x_flat = x2d.reshape(n_pad * hp0, wc0)       # image-major, pitch hp0 rows

    ho_l, wo_l, cout_l = fused["out_ho"], fused["out_wo"], fused["out_cout"]
    wc_out = meta[-1]["wc_out"]

    weight_args, weight_specs = [], []
    for layer in fused["layers"]:
        for arr in (layer["M"], layer["b_row"]):
            weight_args.append(arr)
            # Constant index_map: fetched once per grid; double-buffering these
            # ~0.4 MiB is negligible (pl.Buffered(1) only worth it at large W).
            weight_specs.append(pl.BlockSpec(arr.shape, _const_index_map(arr.ndim)))

    kernel = functools.partial(_fused_encoder_kernel, meta=meta, nb=nb,
                               negative_slope=neg)
    scratch = [pltpu.VMEM((nb * m["hp"], m["wc_in"]), jnp.float32)
               for m in meta[1:]]

    out = pl.pallas_call(
        kernel,
        out_shape=jax.ShapeDtypeStruct((n_pad * ho_l, wc_out), jnp.float32),
        grid=(n_steps,),
        in_specs=[pl.BlockSpec((nb * hp0, wc0), lambda g: (g, 0))] + weight_specs,
        out_specs=pl.BlockSpec((nb * ho_l, wc_out), lambda g: (g, 0)),
        scratch_shapes=scratch,
        compiler_params=pltpu.CompilerParams(
            dimension_semantics=("parallel",),        # <=2 steps -> both v7x TCs
            vmem_limit_bytes=32 * 1024 * 1024),
    )(x_flat, *weight_args)

    out = out.reshape(n_pad, ho_l, wo_l, cout_l)[:n]
    return jnp.transpose(out, (0, 3, 1, 2))          # NCHW


# ----------------------------------------------------------------------------
# Pure-JAX reference (unfolded conv + BatchNorm + LeakyReLU)
# ----------------------------------------------------------------------------
def _reference_forward(params, x_nchw, negative_slope=0.2):
    x = jnp.transpose(x_nchw, (0, 2, 3, 1)).astype(jnp.float32)
    for layer in params:
        k = layer["w"].shape[0]
        p = (k - 1) // 2
        x = lax.conv_general_dilated(
            x, layer["w"], (layer["stride"], layer["stride"]),
            [(p, p), (p, p)], dimension_numbers=("NHWC", "HWIO", "NHWC"))
        x = x + layer["b"].reshape(1, 1, 1, -1)
        bn = layer.get("bn")
        if bn is not None:
            x = (x - bn["mean"]) / jnp.sqrt(bn["var"] + bn["eps"]) \
                * bn["gamma"] + bn["beta"]
        if layer["act"]:
            x = jnp.where(x >= 0, x, negative_slope * x)
    return jnp.transpose(x, (0, 3, 1, 2))


if __name__ == "__main__":
    key = jax.random.PRNGKey(0)
    kp, kx = jax.random.split(key)

    in_channels, num_downsample, latent_channels = 4, 2, 32
    height = width = 16
    batch = 4            # 2 "parallel" grid steps x 2 images stacked per step

    params = init_vanilla_encoder_params(
        kp, in_channels=in_channels, num_downsample=num_downsample,
        latent_channels=latent_channels, kernel_size=3, first_kernel_size=7)
    folded = fold_batchnorm(params)
    fused = prepare_fused_layers(folded, height, width,
                                 images_per_step=2, negative_slope=0.2)

    x = jax.random.normal(kx, (batch, in_channels, height, width), jnp.float32)

    fwd = jax.jit(lambda inp: vanilla_encoder_forward(fused, inp))
    out = jax.block_until_ready(fwd(x))
    assert out.shape == (batch, latent_channels, 4, 4), out.shape

    ref = jax.block_until_ready(_reference_forward(params, x))
    max_err = float(jnp.max(jnp.abs(out - ref)))
    # bf16 weights + bf16 activations at the MXU inputs; f32 accumulation.
    assert jnp.allclose(out, ref, rtol=2e-2, atol=2e-2), max_err

    print("KERNEL_OK")
</pallas_src>

<mosaic_0001>
module attributes {stable_mosaic.version = 11 : i64} {
  func.func @_fused_encoder_kernel(%arg0: i32, %arg1: memref<48x128xf32, #tpu.memory_space<vmem>>, %arg2: memref<896x128xbf16, #tpu.memory_space<vmem>>, %arg3: memref<1x128xf32, #tpu.memory_space<vmem>>, %arg4: memref<384x128xbf16, #tpu.memory_space<vmem>>, %arg5: memref<1x128xf32, #tpu.memory_space<vmem>>, %arg6: memref<384x128xbf16, #tpu.memory_space<vmem>>, %arg7: memref<1x128xf32, #tpu.memory_space<vmem>>, %arg8: memref<8x128xf32, #tpu.memory_space<vmem>>, %arg9: memref<36x128xf32, #tpu.memory_space<vmem>>, %arg10: memref<20x128xf32, #tpu.memory_space<vmem>>) attributes {dimension_semantics = [#tpu.dimension_semantics<parallel>], iteration_bounds = array<i64: 2>, scalar_prefetch = 0 : i64, scratch_operands = 2 : i64, tpu.core_type = #tpu.core_type<tc>, window_params = [{transform_indices = @transform_0, window_bounds = array<i64: 48, 128>}, {pipeline_mode = #tpu.pipeline_mode<synchronous>, transform_indices = @transform_1, window_bounds = array<i64: 896, 128>}, {pipeline_mode = #tpu.pipeline_mode<synchronous>, transform_indices = @transform_2, window_bounds = array<i64: 1, 128>}, {pipeline_mode = #tpu.pipeline_mode<synchronous>, transform_indices = @transform_3, window_bounds = array<i64: 384, 128>}, {pipeline_mode = #tpu.pipeline_mode<synchronous>, transform_indices = @transform_4, window_bounds = array<i64: 1, 128>}, {pipeline_mode = #tpu.pipeline_mode<synchronous>, transform_indices = @transform_5, window_bounds = array<i64: 384, 128>}, {pipeline_mode = #tpu.pipeline_mode<synchronous>, transform_indices = @transform_6, window_bounds = array<i64: 1, 128>}, {transform_indices = @transform_7, window_bounds = array<i64: 8, 128>}]} {
    %c0 = arith.constant 0 : index
    %c0_0 = arith.constant 0 : index
    %0 = vector.load %arg1[%c0, %c0_0] : memref<48x128xf32, #tpu.memory_space<vmem>>, vector<16x128xf32>
    %c1 = arith.constant 1 : index
    %c0_1 = arith.constant 0 : index
    %1 = vector.load %arg1[%c1, %c0_1] : memref<48x128xf32, #tpu.memory_space<vmem>>, vector<16x128xf32>
    %c2 = arith.constant 2 : index
    %c0_2 = arith.constant 0 : index
    %2 = vector.load %arg1[%c2, %c0_2] : memref<48x128xf32, #tpu.memory_space<vmem>>, vector<16x128xf32>
    %c3 = arith.constant 3 : index
    %c0_3 = arith.constant 0 : index
    %3 = vector.load %arg1[%c3, %c0_3] : memref<48x128xf32, #tpu.memory_space<vmem>>, vector<16x128xf32>
    %c4 = arith.constant 4 : index
    %c0_4 = arith.constant 0 : index
    %4 = vector.load %arg1[%c4, %c0_4] : memref<48x128xf32, #tpu.memory_space<vmem>>, vector<16x128xf32>
    %c5 = arith.constant 5 : index
    %c0_5 = arith.constant 0 : index
    %5 = vector.load %arg1[%c5, %c0_5] : memref<48x128xf32, #tpu.memory_space<vmem>>, vector<16x128xf32>
    %c6 = arith.constant 6 : index
    %c0_6 = arith.constant 0 : index
    %6 = vector.load %arg1[%c6, %c0_6] : memref<48x128xf32, #tpu.memory_space<vmem>>, vector<16x128xf32>
    %7 = tpu.concatenate %0, %1, %2, %3, %4, %5, %6 in 1 : vector<16x128xf32>, vector<16x128xf32>, vector<16x128xf32>, vector<16x128xf32>, vector<16x128xf32>, vector<16x128xf32>, vector<16x128xf32> -> vector<16x896xf32>
    %c24 = arith.constant 24 : index
    %c0_7 = arith.constant 0 : index
    %8 = vector.load %arg1[%c24, %c0_7] : memref<48x128xf32, #tpu.memory_space<vmem>>, vector<16x128xf32>
    %c25 = arith.constant 25 : index
    %c0_8 = arith.constant 0 : index
    %9 = vector.load %arg1[%c25, %c0_8] : memref<48x128xf32, #tpu.memory_space<vmem>>, vector<16x128xf32>
    %c26 = arith.constant 26 : index
    %c0_9 = arith.constant 0 : index
    %10 = vector.load %arg1[%c26, %c0_9] : memref<48x128xf32, #tpu.memory_space<vmem>>, vector<16x128xf32>
    %c27 = arith.constant 27 : index
    %c0_10 = arith.constant 0 : index
    %11 = vector.load %arg1[%c27, %c0_10] : memref<48x128xf32, #tpu.memory_space<vmem>>, vector<16x128xf32>
    %c28 = arith.constant 28 : index
    %c0_11 = arith.constant 0 : index
    %12 = vector.load %arg1[%c28, %c0_11] : memref<48x128xf32, #tpu.memory_space<vmem>>, vector<16x128xf32>
    %c29 = arith.constant 29 : index
    %c0_12 = arith.constant 0 : index
    %13 = vector.load %arg1[%c29, %c0_12] : memref<48x128xf32, #tpu.memory_space<vmem>>, vector<16x128xf32>
    %c30 = arith.constant 30 : index
    %c0_13 = arith.constant 0 : index
    %14 = vector.load %arg1[%c30, %c0_13] : memref<48x128xf32, #tpu.memory_space<vmem>>, vector<16x128xf32>
    %15 = tpu.concatenate %8, %9, %10, %11, %12, %13, %14 in 1 : vector<16x128xf32>, vector<16x128xf32>, vector<16x128xf32>, vector<16x128xf32>, vector<16x128xf32>, vector<16x128xf32>, vector<16x128xf32> -> vector<16x896xf32>
    %16 = tpu.concatenate %7, %15 in 0 : vector<16x896xf32>, vector<16x896xf32> -> vector<32x896xf32>
    %17 = arith.truncf %16 : vector<32x896xf32> to vector<32x896xbf16>
    %c0_14 = arith.constant 0 : index
    %c0_15 = arith.constant 0 : index
    %18 = vector.load %arg2[%c0_14, %c0_15] : memref<896x128xbf16, #tpu.memory_space<vmem>>, vector<896x128xbf16>
    %cst = arith.constant dense<0.000000e+00> : vector<32x128xf32>
    %19 = tpu.matmul %17, %18, %cst {dimension_numbers = #tpu.dot_dimension_numbers<[1], [0], [0], [1], [0, 0, 1, 1], [], []>} : vector<32x896xbf16>, vector<896x128xbf16>, vector<32x128xf32> -> vector<32x128xf32>
    %c0_16 = arith.constant 0 : index
    %c0_17 = arith.constant 0 : index
    %20 = vector.load %arg3[%c0_16, %c0_17] : memref<1x128xf32, #tpu.memory_space<vmem>>, vector<1x128xf32>
    %21 = vector.broadcast %20 : vector<1x128xf32> to vector<32x128xf32>
    %22 = arith.addf %19, %21 : vector<32x128xf32>
    %cst_18 = arith.constant 0.000000e+00 : f32
    %23 = vector.broadcast %cst_18 : f32 to vector<32x128xf32>
    %24 = arith.cmpf oge, %22, %23 : vector<32x128xf32>
    %cst_19 = arith.constant 2.000000e-01 : f32
    %25 = vector.broadcast %cst_19 : f32 to vector<32x128xf32>
    %26 = arith.mulf %25, %22 : vector<32x128xf32>
    %27 = arith.select %24, %22, %26 : vector<32x128xi1>, vector<32x128xf32>
    %cst_20 = arith.constant 0.000000e+00 : f32
    %28 = vector.broadcast %cst_20 : f32 to vector<1x128xf32>
    %29 = vector.extract_strided_slice %27 {offsets = [0, 0], sizes = [16, 128], strides = [1, 1]} : vector<32x128xf32> to vector<16x128xf32>
    %30 = tpu.concatenate %28, %29, %28 in 0 : vector<1x128xf32>, vector<16x128xf32>, vector<1x128xf32> -> vector<18x128xf32>
    %c0_21 = arith.constant 0 : index
    %c0_22 = arith.constant 0 : index
    %31 = vector.load %arg9[%c0_21, %c0_22] : memref<36x128xf32, #tpu.memory_space<vmem>>, vector<18x128xf32>
    tpu.vector_store %arg9[%c0_21, %c0_22], %30 {strides = array<i32>} : memref<36x128xf32, #tpu.memory_space<vmem>>, vector<18x128xf32>,
    %32 = vector.extract_strided_slice %27 {offsets = [16, 0], sizes = [16, 128], strides = [1, 1]} : vector<32x128xf32> to vector<16x128xf32>
    %33 = tpu.concatenate %28, %32, %28 in 0 : vector<1x128xf32>, vector<16x128xf32>, vector<1x128xf32> -> vector<18x128xf32>
    %c18 = arith.constant 18 : index
    %c0_23 = arith.constant 0 : index
    %34 = vector.load %arg9[%c18, %c0_23] : memref<36x128xf32, #tpu.memory_space<vmem>>, vector<18x128xf32>
    tpu.vector_store %arg9[%c18, %c0_23], %33 {strides = array<i32>} : memref<36x128xf32, #tpu.memory_space<vmem>>, vector<18x128xf32>,
    %c0_24 = arith.constant 0 : index
    %c0_25 = arith.constant 0 : index
    %35 = tpu.strided_load %arg9[%c0_24, %c0_25] {strides = array<i32: 2, 1>} : memref<36x128xf32, #tpu.memory_space<vmem>>, vector<8x128xf32>
    %c1_26 = arith.constant 1 : index
    %c0_27 = arith.constant 0 : index
    %36 = tpu.strided_load %arg9[%c1_26, %c0_27] {strides = array<i32: 2, 1>} : memref<36x128xf32, #tpu.memory_space<vmem>>, vector<8x128xf32>
    %c2_28 = arith.constant 2 : index
    %c0_29 = arith.constant 0 : index
    %37 = tpu.strided_load %arg9[%c2_28, %c0_29] {strides = array<i32: 2, 1>} : memref<36x128xf32, #tpu.memory_space<vmem>>, vector<8x128xf32>
    %38 = tpu.concatenate %35, %36, %37 in 1 : vector<8x128xf32>, vector<8x128xf32>, vector<8x128xf32> -> vector<8x384xf32>
    %c18_30 = arith.constant 18 : index
    %c0_31 = arith.constant 0 : index
    %39 = tpu.strided_load %arg9[%c18_30, %c0_31] {strides = array<i32: 2, 1>} : memref<36x128xf32, #tpu.memory_space<vmem>>, vector<8x128xf32>
    %c19 = arith.constant 19 : index
    %c0_32 = arith.constant 0 : index
    %40 = tpu.strided_load %arg9[%c19, %c0_32] {strides = array<i32: 2, 1>} : memref<36x128xf32, #tpu.memory_space<vmem>>, vector<8x128xf32>
    %c20 = arith.constant 20 : index
    %c0_33 = arith.constant 0 : index
    %41 = tpu.strided_load %arg9[%c20, %c0_33] {strides = array<i32: 2, 1>} : memref<36x128xf32, #tpu.memory_space<vmem>>, vector<8x128xf32>
    %42 = tpu.concatenate %39, %40, %41 in 1 : vector<8x128xf32>, vector<8x128xf32>, vector<8x128xf32> -> vector<8x384xf32>
    %43 = tpu.concatenate %38, %42 in 0 : vector<8x384xf32>, vector<8x384xf32> -> vector<16x384xf32>
    %44 = arith.truncf %43 : vector<16x384xf32> to vector<16x384xbf16>
    %c0_34 = arith.constant 0 : index
    %c0_35 = arith.constant 0 : index
    %45 = vector.load %arg4[%c0_34, %c0_35] : memref<384x128xbf16, #tpu.memory_space<vmem>>, vector<384x128xbf16>
    %cst_36 = arith.constant dense<0.000000e+00> : vector<16x128xf32>
    %46 = tpu.matmul %44, %45, %cst_36 {dimension_numbers = #tpu.dot_dimension_numbers<[1], [0], [0], [1], [0, 0, 1, 1], [], []>} : vector<16x384xbf16>, vector<384x128xbf16>, vector<16x128xf32> -> vector<16x128xf32>
    %c0_37 = arith.constant 0 : index
    %c0_38 = arith.constant 0 : index
    %47 = vector.load %arg5[%c0_37, %c0_38] : memref<1x128xf32, #tpu.memory_space<vmem>>, vector<1x128xf32>
    %48 = vector.broadcast %47 : vector<1x128xf32> to vector<16x128xf32>
    %49 = arith.addf %46, %48 : vector<16x128xf32>
    %cst_39 = arith.constant 0.000000e+00 : f32
    %50 = vector.broadcast %cst_39 : f32 to vector<16x128xf32>
    %51 = arith.cmpf oge, %49, %50 : vector<16x128xf32>
    %cst_40 = arith.constant 2.000000e-01 : f32
    %52 = vector.broadcast %cst_40 : f32 to vector<16x128xf32>
    %53 = arith.mulf %52, %49 : vector<16x128xf32>
    %54 = arith.select %51, %49, %53 : vector<16x128xi1>, vector<16x128xf32>
    %cst_41 = arith.constant 0.000000e+00 : f32
    %55 = vector.broadcast %cst_41 : f32 to vector<1x128xf32>
    %56 = vector.extract_strided_slice %54 {offsets = [0, 0], sizes = [8, 128], strides = [1, 1]} : vector<16x128xf32> to vector<8x128xf32>
    %57 = tpu.concatenate %55, %56, %55 in 0 : vector<1x128xf32>, vector<8x128xf32>, vector<1x128xf32> -> vector<10x128xf32>
    %c0_42 = arith.constant 0 : index
    %c0_43 = arith.constant 0 : index
    %58 = vector.load %arg10[%c0_42, %c0_43] : memref<20x128xf32, #tpu.memory_space<vmem>>, vector<10x128xf32>
    tpu.vector_store %arg10[%c0_42, %c0_43], %57 {strides = array<i32>} : memref<20x128xf32, #tpu.memory_space<vmem>>, vector<10x128xf32>,
    %59 = vector.extract_strided_slice %54 {offsets = [8, 0], sizes = [8, 128], strides = [1, 1]} : vector<16x128xf32> to vector<8x128xf32>
    %60 = tpu.concatenate %55, %59, %55 in 0 : vector<1x128xf32>, vector<8x128xf32>, vector<1x128xf32> -> vector<10x128xf32>
    %c10 = arith.constant 10 : index
    %c0_44 = arith.constant 0 : index
    %61 = vector.load %arg10[%c10, %c0_44] : memref<20x128xf32, #tpu.memory_space<vmem>>, vector<10x128xf32>
    tpu.vector_store %arg10[%c10, %c0_44], %60 {strides = array<i32>} : memref<20x128xf32, #tpu.memory_space<vmem>>, vector<10x128xf32>,
    %c0_45 = arith.constant 0 : index
    %c0_46 = arith.constant 0 : index
    %62 = tpu.strided_load %arg10[%c0_45, %c0_46] {strides = array<i32: 2, 1>} : memref<20x128xf32, #tpu.memory_space<vmem>>, vector<4x128xf32>
    %c1_47 = arith.constant 1 : index
    %c0_48 = arith.constant 0 : index
    %63 = tpu.strided_load %arg10[%c1_47, %c0_48] {strides = array<i32: 2, 1>} : memref<20x128xf32, #tpu.memory_space<vmem>>, vector<4x128xf32>
    %c2_49 = arith.constant 2 : index
    %c0_50 = arith.constant 0 : index
    %64 = tpu.strided_load %arg10[%c2_49, %c0_50] {strides = array<i32: 2, 1>} : memref<20x128xf32, #tpu.memory_space<vmem>>, vector<4x128xf32>
    %65 = tpu.concatenate %62, %63, %64 in 1 : vector<4x128xf32>, vector<4x128xf32>, vector<4x128xf32> -> vector<4x384xf32>
    %c10_51 = arith.constant 10 : index
    %c0_52 = arith.constant 0 : index
    %66 = tpu.strided_load %arg10[%c10_51, %c0_52] {strides = array<i32: 2, 1>} : memref<20x128xf32, #tpu.memory_space<vmem>>, vector<4x128xf32>
    %c11 = arith.constant 11 : index
    %c0_53 = arith.constant 0 : index
    %67 = tpu.strided_load %arg10[%c11, %c0_53] {strides = array<i32: 2, 1>} : memref<20x128xf32, #tpu.memory_space<vmem>>, vector<4x128xf32>
    %c12 = arith.constant 12 : index
    %c0_54 = arith.constant 0 : index
    %68 = tpu.strided_load %arg10[%c12, %c0_54] {strides = array<i32: 2, 1>} : memref<20x128xf32, #tpu.memory_space<vmem>>, vector<4x128xf32>
    %69 = tpu.concatenate %66, %67, %68 in 1 : vector<4x128xf32>, vector<4x128xf32>, vector<4x128xf32> -> vector<4x384xf32>
    %70 = tpu.concatenate %65, %69 in 0 : vector<4x384xf32>, vector<4x384xf32> -> vector<8x384xf32>
    %71 = arith.truncf %70 : vector<8x384xf32> to vector<8x384xbf16>
    %c0_55 = arith.constant 0 : index
    %c0_56 = arith.constant 0 : index
    %72 = vector.load %arg6[%c0_55, %c0_56] : memref<384x128xbf16, #tpu.memory_space<vmem>>, vector<384x128xbf16>
    %cst_57 = arith.constant dense<0.000000e+00> : vector<8x128xf32>
    %73 = tpu.matmul %71, %72, %cst_57 {dimension_numbers = #tpu.dot_dimension_numbers<[1], [0], [0], [1], [0, 0, 1, 1], [], []>} : vector<8x384xbf16>, vector<384x128xbf16>, vector<8x128xf32> -> vector<8x128xf32>
    %c0_58 = arith.constant 0 : index
    %c0_59 = arith.constant 0 : index
    %74 = vector.load %arg7[%c0_58, %c0_59] : memref<1x128xf32, #tpu.memory_space<vmem>>, vector<1x128xf32>
    %75 = vector.broadcast %74 : vector<1x128xf32> to vector<8x128xf32>
    %76 = arith.addf %73, %75 : vector<8x128xf32>
    %c0_60 = arith.constant 0 : index
    %c0_61 = arith.constant 0 : index
    %77 = vector.load %arg8[%c0_60, %c0_61] : memref<8x128xf32, #tpu.memory_space<vmem>>, vector<8x128xf32>
    tpu.vector_store %arg8[%c0_60, %c0_61], %76 {strides = array<i32>} : memref<8x128xf32, #tpu.memory_space<vmem>>, vector<8x128xf32>,
    return
  }
  func.func @transform_0(%arg0: i32) -> (i32, i32) {
    %c0_i32 = arith.constant 0 : i32
    %c0_i32_0 = arith.constant 0 : i32
    return %arg0, %c0_i32 : i32, i32
  }
  func.func @transform_1(%arg0: i32) -> (i32, i32) {
    %c0_i32 = arith.constant 0 : i32
    %c0_i32_0 = arith.constant 0 : i32
    %c0_i32_1 = arith.constant 0 : i32
    return %c0_i32, %c0_i32_0 : i32, i32
  }
  func.func @transform_2(%arg0: i32) -> (i32, i32) {
    %c0_i32 = arith.constant 0 : i32
    %c0_i32_0 = arith.constant 0 : i32
    %c0_i32_1 = arith.constant 0 : i32
    return %c0_i32, %c0_i32_0 : i32, i32
  }
  func.func @transform_3(%arg0: i32) -> (i32, i32) {
    %c0_i32 = arith.constant 0 : i32
    %c0_i32_0 = arith.constant 0 : i32
    %c0_i32_1 = arith.constant 0 : i32
    return %c0_i32, %c0_i32_0 : i32, i32
  }
  func.func @transform_4(%arg0: i32) -> (i32, i32) {
    %c0_i32 = arith.constant 0 : i32
    %c0_i32_0 = arith.constant 0 : i32
    %c0_i32_1 = arith.constant 0 : i32
    return %c0_i32, %c0_i32_0 : i32, i32
  }
  func.func @transform_5(%arg0: i32) -> (i32, i32) {
    %c0_i32 = arith.constant 0 : i32
    %c0_i32_0 = arith.constant 0 : i32
    %c0_i32_1 = arith.constant 0 : i32
    return %c0_i32, %c0_i32_0 : i32, i32
  }
  func.func @transform_6(%arg0: i32) -> (i32, i32) {
    %c0_i32 = arith.constant 0 : i32
    %c0_i32_0 = arith.constant 0 : i32
    %c0_i32_1 = arith.constant 0 : i32
    return %c0_i32, %c0_i32_0 : i32, i32
  }
  func.func @transform_7(%arg0: i32) -> (i32, i32) {
    %c0_i32 = arith.constant 0 : i32
    %c0_i32_0 = arith.constant 0 : i32
    return %arg0, %c0_i32 : i32, i32
  }
}

</mosaic_0001>

<llo_original>
// kernel: _lambda_.1
$region0: #{_lambda_.1}
  #allocation0 [shape = 'u32[]', space=smem, size = 0x4, offset = 0x4, fixed_abs, tag = 'smem constant byte address 0x4 - core index']
  #allocation1 [shape = 'u32[72,128]{1,0:T(1,128)}', space=vmem, size = 0x9000, scoped, tag = 'internal scratch']
  #allocation2 [shape = 'f32[36,128]{1,0:T(8,128)}', space=vmem, size = 0x5000, scoped, tag = 'scratch operand']
  #allocation3 [shape = 'f32[20,128]{1,0:T(8,128)}', space=vmem, size = 0x3000, scoped, tag = 'scratch operand']
  %s0 = inlined_call_operand.vmem [shape: f32[96,128], index: 0, kind: input, shape index: {}]
  %s1 = inlined_call_operand.vmem [shape: bf16[896,128], index: 1, kind: input, shape index: {}]
  %s2 = inlined_call_operand.vmem [shape: f32[1,128], index: 2, kind: input, shape index: {}]
  %s3 = inlined_call_operand.vmem [shape: bf16[384,128], index: 3, kind: input, shape index: {}]
  %s4 = inlined_call_operand.vmem [shape: f32[1,128], index: 4, kind: input, shape index: {}]
  %s5 = inlined_call_operand.vmem [shape: bf16[384,128], index: 5, kind: input, shape index: {}]
  %s6 = inlined_call_operand.vmem [shape: f32[1,128], index: 6, kind: input, shape index: {}]
  %s7 = inlined_call_operand.vmem [shape: f32[16,128], index: 7, kind: output, shape index: {}]
  %s8 = sld [smem:[#allocation0]]
  $region61: #{_lambda_.1} parent=0
    _
  %s10 = ssub.s32 1, %s8
  %s11 = scalar_select 0, %s10, %s8
  loop: start=0, step=1, limit=4
  $region2: #{_lambda_.1} parent=0 // loop_pre_header
    _
  $region3: #{_lambda_.1} parent=0 // loop_header
    %s13 = sphi 0, %s17
    %p14 = scmp.ge.s32.totalorder %s13, 4
    %s23 = sphi 0, %s25
    %s26 = sphi 0, %s23
    %s27 = sphi 0, %s26
    %s43 = sphi 0, %s27
    %s47 = sphi 0, %s47
    %s49 = sphi 0, %s47
    %s50 = sphi 0, %s49
    %s64 = sphi 0, %s50
    %s68 = sphi 0, %s68
    %s70 = sphi 0, %s68
    %s71 = sphi 0, %s70
    %s85 = sphi 0, %s71
    %s89 = sphi 0, %s89
    %s91 = sphi 0, %s89
    %s92 = sphi 0, %s91
    %s106 = sphi 0, %s92
    %s110 = sphi 0, %s110
    %s112 = sphi 0, %s110
    %s113 = sphi 0, %s112
    %s127 = sphi 0, %s113
    %s131 = sphi 0, %s131
    %s133 = sphi 0, %s131
    %s134 = sphi 0, %s133
    %s148 = sphi 0, %s134
    %s152 = sphi 0, %s152
    %s154 = sphi 0, %s152
    %s155 = sphi 0, %s154
    %s169 = sphi 0, %s155
    %s175 = sphi 0, %s177
    %s178 = sphi 0, %s175
    %s179 = sphi 0, %s178
    %s195 = sphi 0, %s179
  $region4: #{_lambda_.1} parent=0 // loop_header_branch
    %16 = sbr.rel (%p14) target = $region8
  $region5: #{_lambda_.1} parent=0 // loop_body
    %s18 = ssub.s32 %s13, 1
    %s19 = ssub.s32 %s13, 2
    %s20 = sadd.s32 %s13, 1
    %s21 = ssub.s32 %s13, %s20
    %p22 = scmp.eq.s32.totalorder %s21, 0
    %s24 = sadd.s32 %s23, 1
    %s25 = scalar_select %p22, %s23, %s24
    %p28 = pneg %p22
    %p29 = scmp.eq.s32.totalorder %s13, 1
    %p30 = por %p28, %p29
    %p31 = scmp.ne.s32.totalorder %s23, %s26
    %p32 = scmp.eq.s32.totalorder %s13, 0
    %p33 = por %p31, %p32
    %p34 = scmp.ne.s32.totalorder %s23, %s26
    %p35 = scmp.eq.s32.totalorder %s18, 1
    %p36 = por %p34, %p35
    %p37 = scmp.ne.s32.totalorder %s26, %s27
    %p38 = scmp.eq.s32.totalorder %s18, 0
    %p39 = por %p37, %p38
    %p40 = scmp.ne.s32.totalorder %s26, %s27
    %p41 = scmp.eq.s32.totalorder %s19, 1
    %p42 = por %p40, %p41
    %p44 = scmp.ne.s32.totalorder %s27, %s43
    %p45 = scmp.eq.s32.totalorder %s19, 0
    %p46 = por %p44, %p45
    %s48 = sadd.s32 %s47, 1
    %p51 = scmp.eq.s32.totalorder %s13, 1
    %p52 = scmp.ne.s32.totalorder %s47, %s49
    %p53 = scmp.eq.s32.totalorder %s13, 0
    %p54 = por %p52, %p53
    %p55 = scmp.ne.s32.totalorder %s47, %s49
    %p56 = scmp.eq.s32.totalorder %s18, 1
    %p57 = por %p55, %p56
    %p58 = scmp.ne.s32.totalorder %s49, %s50
    %p59 = scmp.eq.s32.totalorder %s18, 0
    %p60 = por %p58, %p59
    %p61 = scmp.ne.s32.totalorder %s49, %s50
    %p62 = scmp.eq.s32.totalorder %s19, 1
    %p63 = por %p61, %p62
    %p65 = scmp.ne.s32.totalorder %s50, %s64
    %p66 = scmp.eq.s32.totalorder %s19, 0
    %p67 = por %p65, %p66
    %s69 = sadd.s32 %s68, 1
    %p72 = scmp.eq.s32.totalorder %s13, 1
    %p73 = scmp.ne.s32.totalorder %s68, %s70
    %p74 = scmp.eq.s32.totalorder %s13, 0
    %p75 = por %p73, %p74
    %p76 = scmp.ne.s32.totalorder %s68, %s70
    %p77 = scmp.eq.s32.totalorder %s18, 1
    %p78 = por %p76, %p77
    %p79 = scmp.ne.s32.totalorder %s70, %s71
    %p80 = scmp.eq.s32.totalorder %s18, 0
    %p81 = por %p79, %p80
    %p82 = scmp.ne.s32.totalorder %s70, %s71
    %p83 = scmp.eq.s32.totalorder %s19, 1
    %p84 = por %p82, %p83
    %p86 = scmp.ne.s32.totalorder %s71, %s85
    %p87 = scmp.eq.s32.totalorder %s19, 0
    %p88 = por %p86, %p87
    %s90 = sadd.s32 %s89, 1
    %p93 = scmp.eq.s32.totalorder %s13, 1
    %p94 = scmp.ne.s32.totalorder %s89, %s91
    %p95 = scmp.eq.s32.totalorder %s13, 0
    %p96 = por %p94, %p95
    %p97 = scmp.ne.s32.totalorder %s89, %s91
    %p98 = scmp.eq.s32.totalorder %s18, 1
    %p99 = por %p97, %p98
    %p100 = scmp.ne.s32.totalorder %s91, %s92
    %p101 = scmp.eq.s32.totalorder %s18, 0
    %p102 = por %p100, %p101
    %p103 = scmp.ne.s32.totalorder %s91, %s92
    %p104 = scmp.eq.s32.totalorder %s19, 1
    %p105 = por %p103, %p104
    %p107 = scmp.ne.s32.totalorder %s92, %s106
    %p108 = scmp.eq.s32.totalorder %s19, 0
    %p109 = por %p107, %p108
    %s111 = sadd.s32 %s110, 1
    %p114 = scmp.eq.s32.totalorder %s13, 1
    %p115 = scmp.ne.s32.totalorder %s110, %s112
    %p116 = scmp.eq.s32.totalorder %s13, 0
    %p117 = por %p115, %p116
    %p118 = scmp.ne.s32.totalorder %s110, %s112
    %p119 = scmp.eq.s32.totalorder %s18, 1
    %p120 = por %p118, %p119
    %p121 = scmp.ne.s32.totalorder %s112, %s113
    %p122 = scmp.eq.s32.totalorder %s18, 0
    %p123 = por %p121, %p122
    %p124 = scmp.ne.s32.totalorder %s112, %s113
    %p125 = scmp.eq.s32.totalorder %s19, 1
    %p126 = por %p124, %p125
    %p128 = scmp.ne.s32.totalorder %s113, %s127
    %p129 = scmp.eq.s32.totalorder %s19, 0
    %p130 = por %p128, %p129
    %s132 = sadd.s32 %s131, 1
    %p135 = scmp.eq.s32.totalorder %s13, 1
    %p136 = scmp.ne.s32.totalorder %s131, %s133
    %p137 = scmp.eq.s32.totalorder %s13, 0
    %p138 = por %p136, %p137
    %p139 = scmp.ne.s32.totalorder %s131, %s133
    %p140 = scmp.eq.s32.totalorder %s18, 1
    %p141 = por %p139, %p140
    %p142 = scmp.ne.s32.totalorder %s133, %s134
    %p143 = scmp.eq.s32.totalorder %s18, 0
    %p144 = por %p142, %p143
    %p145 = scmp.ne.s32.totalorder %s133, %s134
    %p146 = scmp.eq.s32.totalorder %s19, 1
    %p147 = por %p145, %p146
    %p149 = scmp.ne.s32.totalorder %s134, %s148
    %p150 = scmp.eq.s32.totalorder %s19, 0
    %p151 = por %p149, %p150
    %s153 = sadd.s32 %s152, 1
    %p156 = scmp.eq.s32.totalorder %s13, 1
    %p157 = scmp.ne.s32.totalorder %s152, %s154
    %p158 = scmp.eq.s32.totalorder %s13, 0
    %p159 = por %p157, %p158
    %p160 = scmp.ne.s32.totalorder %s152, %s154
    %p161 = scmp.eq.s32.totalorder %s18, 1
    %p162 = por %p160, %p161
    %p163 = scmp.ne.s32.totalorder %s154, %s155
    %p164 = scmp.eq.s32.totalorder %s18, 0
    %p165 = por %p163, %p164
    %p166 = scmp.ne.s32.totalorder %s154, %s155
    %p167 = scmp.eq.s32.totalorder %s19, 1
    %p168 = por %p166, %p167
    %p170 = scmp.ne.s32.totalorder %s155, %s169
    %p171 = scmp.eq.s32.totalorder %s19, 0
    %p172 = por %p170, %p171
    %s173 = ssub.s32 %s13, %s20
    %p174 = scmp.eq.s32.totalorder %s173, 0
    %s176 = sadd.s32 %s175, 1
    %s177 = scalar_select %p174, %s175, %s176
    %p180 = pneg %p174
    %p181 = scmp.eq.s32.totalorder %s13, 1
    %p182 = por %p180, %p181
    %p183 = scmp.ne.s32.totalorder %s175, %s178
    %p184 = scmp.eq.s32.totalorder %s13, 0
    %p185 = por %p183, %p184
    %p186 = scmp.ne.s32.totalorder %s175, %s178
    %p187 = scmp.eq.s32.totalorder %s18, 1
    %p188 = por %p186, %p187
    %p189 = scmp.ne.s32.totalorder %s178, %s179
    %p190 = scmp.eq.s32.totalorder %s18, 0
    %p191 = por %p189, %p190
    %p192 = scmp.ne.s32.totalorder %s178, %s179
    %p193 = scmp.eq.s32.totalorder %s19, 1
    %p194 = por %p192, %p193
    %p196 = scmp.ne.s32.totalorder %s179, %s195
    %p197 = scmp.eq.s32.totalorder %s19, 0
    %p198 = por %p196, %p197
    %p199 = scmp.le.s32.totalorder 1, %s13
    %p200 = scmp.lt.s32.totalorder %s13, 3
    %p201 = pnand %p199, %p200
    %p202 = pneg %p201
    // Predicated region
    $region9: #{_lambda_.1} parent=5 // pred_check
      _
    $region10: #{_lambda_.1} parent=5 // pred_check_branch
      %204 = sbr.rel (%p201) target = $region12
    $region11: #{_lambda_.1} parent=5 // pred_region
      %s205 = ssub.s32 %s13, 1
      // Predicated region
      $region13: #{_lambda_.1} parent=11 // pred_check
        %p206 = pneg %p60
      $region14: #{_lambda_.1} parent=11 // pred_check_branch
        %208 = sbr.rel (%p206) target = $region16
      $region15: #{_lambda_.1} parent=11 // pred_region
        _
      $region16: #{_lambda_.1} parent=11 // pred_fallthru
        _
      // Predicated region
      $region17: #{_lambda_.1} parent=11 // pred_check
        %p209 = pneg %p81
      $region18: #{_lambda_.1} parent=11 // pred_check_branch
        %211 = sbr.rel (%p209) target = $region20
      $region19: #{_lambda_.1} parent=11 // pred_region
        _
      $region20: #{_lambda_.1} parent=11 // pred_fallthru
        _
      // Predicated region
      $region21: #{_lambda_.1} parent=11 // pred_check
        %p212 = pneg %p102
      $region22: #{_lambda_.1} parent=11 // pred_check_branch
        %214 = sbr.rel (%p212) target = $region24
      $region23: #{_lambda_.1} parent=11 // pred_region
        _
      $region24: #{_lambda_.1} parent=11 // pred_fallthru
        _
      // Predicated region
      $region25: #{_lambda_.1} parent=11 // pred_check
        %p215 = pneg %p123
      $region26: #{_lambda_.1} parent=11 // pred_check_branch
        %217 = sbr.rel (%p215) target = $region28
      $region27: #{_lambda_.1} parent=11 // pred_region
        _
      $region28: #{_lambda_.1} parent=11 // pred_fallthru
        _
      // Predicated region
      $region29: #{_lambda_.1} parent=11 // pred_check
        %p218 = pneg %p144
      $region30: #{_lambda_.1} parent=11 // pred_check_branch
        %220 = sbr.rel (%p218) target = $region32
      $region31: #{_lambda_.1} parent=11 // pred_region
        _
      $region32: #{_lambda_.1} parent=11 // pred_fallthru
        _
      // Predicated region
      $region33: #{_lambda_.1} parent=11 // pred_check
        %p221 = pneg %p165
      $region34: #{_lambda_.1} parent=11 // pred_check_branch
        %223 = sbr.rel (%p221) target = $region36
      $region35: #{_lambda_.1} parent=11 // pred_region
        _
      $region36: #{_lambda_.1} parent=11 // pred_fallthru
        _
    $region12: #{_lambda_.1} parent=5 // pred_fallthru
      _
    %p224 = scmp.lt.s32.totalorder %s13, 2
    // Predicated region
    $region37: #{_lambda_.1} parent=5 // pred_check
      %p225 = pneg %p224
    $region38: #{_lambda_.1} parent=5 // pred_check_branch
      %227 = sbr.rel (%p225) target = $region40
    $region39: #{_lambda_.1} parent=5 // pred_region
      // Predicated region
      $region41: #{_lambda_.1} parent=39 // pred_check
        %p228 = pneg %p33
      $region42: #{_lambda_.1} parent=39 // pred_check_branch
        %230 = sbr.rel (%p228) target = $region44
      $region43: #{_lambda_.1} parent=39 // pred_region
        %s231 = smul.u32 6, %s13
        %p232 = scmp.lt.s32.totalorder %s231, 11
        %s233 = scalar_select %p232, %s231, 11
        %s234 = smul.addr %s233, 8
        %s235 = scalar_lea.vmem %s0, %s234
        %s236 = smul.u32 6, %s13
      $region44: #{_lambda_.1} parent=39 // pred_fallthru
        _
    $region40: #{_lambda_.1} parent=5 // pred_fallthru
      _
    %p237 = scmp.le.s32.totalorder 1, %s13
    %p238 = scmp.lt.s32.totalorder %s13, 3
    %p239 = pnand %p237, %p238
    %p240 = pneg %p239
    // Predicated region
    $region45: #{_lambda_.1} parent=5 // pred_check
      _
    $region46: #{_lambda_.1} parent=5 // pred_check_branch
      %242 = sbr.rel (%p239) target = $region48
    $region47: #{_lambda_.1} parent=5 // pred_region
      %s243 = ssub.s32 %s13, 1
      %s244 = smul.u32 6, %s18
      %p245 = scmp.lt.s32.totalorder %s244, 11
      %s246 = scalar_select %p245, %s244, 11
      %s247 = smul.addr %s246, 8
      %s248 = scalar_lea.vmem %s0, %s247
      %p249 = pneg %p39
      %p250 = pneg %p36
      %p251 = pneg %p60
      %p252 = pneg %p57
      %p253 = pneg %p81
      %p254 = pneg %p78
      %p255 = pneg %p102
      %p256 = pneg %p99
      %p257 = pneg %p123
      %p258 = pneg %p120
      %p259 = pneg %p144
      %p260 = pneg %p141
      %p261 = pneg %p165
      %p262 = pneg %p162
      %p263 = pneg %p191
      %p264 = pneg %p188
      %p265 = scmp.lt.s32.totalorder %s18, 1
      %s266 = scalar_select %p265, %s18, 1
      %s267 = smul.addr %s266, 8
      %s268 = scalar_lea.vmem %s7, %s267
      %s269 = smul.u32 6, %s18
      %p270 = scmp.lt.s32.totalorder %s269, 11
      %s271 = scalar_select %p270, %s269, 11
      %s272 = smul.addr %s271, 8
      %s273 = scalar_lea.vmem %s0, %s272
      %s274 = smul.u32 6, %s18
      %p275 = scmp.lt.s32.totalorder %s18, 1
      %s276 = scalar_select %p275, %s18, 1
      %s277 = smul.addr %s276, 8
      %s278 = scalar_lea.vmem %s7, %s277
      %v279 = vld [vmem:[%s273] sm:$0xff]
      %v280 = vld [vmem:[%s273 + $0x8] sm:$0xff]
      %v281 = vld [vmem:[%s273 + $0x1] sm:$0xff]
      %v282 = vld [vmem:[%s273 + $0x9] sm:$0xff]
      %v283 = vld [vmem:[%s273 + $0x2] sm:$0xff]
      %v284 = vld [vmem:[%s273 + $0xa] sm:$0xff]
      %v285 = vld [vmem:[%s273 + $0x3] sm:$0xff]
      %v286 = vld [vmem:[%s273 + $0xb] sm:$0xff]
      %v287 = vld [vmem:[%s273 + $0x4] sm:$0xff]
      %v288 = vld [vmem:[%s273 + $0xc] sm:$0xff]
      %v289 = vld [vmem:[%s273 + $0x5] sm:$0xff]
      %v290 = vld [vmem:[%s273 + $0xd] sm:$0xff]
      %v291 = vld [vmem:[%s273 + $0x6] sm:$0xff]
      %v292 = vld [vmem:[%s273 + $0xe] sm:$0xff]
      %v293 = vld [vmem:[%s273 + $0x18] sm:$0xff]
      %v294 = vld [vmem:[%s273 + $0x20] sm:$0xff]
      %v295 = vld [vmem:[%s273 + $0x19] sm:$0xff]
      %v296 = vld [vmem:[%s273 + $0x21] sm:$0xff]
      %v297 = vld [vmem:[%s273 + $0x1a] sm:$0xff]
      %v298 = vld [vmem:[%s273 + $0x22] sm:$0xff]
      %v299 = vld [vmem:[%s273 + $0x1b] sm:$0xff]
      %v300 = vld [vmem:[%s273 + $0x23] sm:$0xff]
      %v301 = vld [vmem:[%s273 + $0x1c] sm:$0xff]
      %v302 = vld [vmem:[%s273 + $0x24] sm:$0xff]
      %v303 = vld [vmem:[%s273 + $0x1d] sm:$0xff]
      %v304 = vld [vmem:[%s273 + $0x25] sm:$0xff]
      %v305 = vld [vmem:[%s273 + $0x1e] sm:$0xff]
      %v306 = vld [vmem:[%s273 + $0x26] sm:$0xff]
      %v307 = vpack.c.bf16 %v280, %v279
      %v308 = vpack.c.bf16 %v282, %v281
      %v309 = vpack.c.bf16 %v284, %v283
      %v310 = vpack.c.bf16 %v286, %v285
      %v311 = vpack.c.bf16 %v288, %v287
      %v312 = vpack.c.bf16 %v290, %v289
      %v313 = vpack.c.bf16 %v292, %v291
      %v314 = vpack.c.bf16 %v294, %v293
      %v315 = vpack.c.bf16 %v296, %v295
      %v316 = vpack.c.bf16 %v298, %v297
      %v317 = vpack.c.bf16 %v300, %v299
      %v318 = vpack.c.bf16 %v302, %v301
      %v319 = vpack.c.bf16 %v304, %v303
      %v320 = vpack.c.bf16 %v306, %v305
      %v321 = vld [vmem:[%s1] sm:$0xf]
      %v322 = vld [vmem:[%s1 + $0x4] sm:$0xf]
      %v323 = vld [vmem:[%s1 + $0x8] sm:$0xf]
      %v324 = vld [vmem:[%s1 + $0xc] sm:$0xf]
      %v325 = vld [vmem:[%s1 + $0x10] sm:$0xf]
      %v326 = vld [vmem:[%s1 + $0x14] sm:$0xf]
      %v327 = vld [vmem:[%s1 + $0x18] sm:$0xf]
      %v328 = vld [vmem:[%s1 + $0x1c] sm:$0xf]
      %v329 = vld [vmem:[%s1 + $0x20] sm:$0xf]
      %v330 = vld [vmem:[%s1 + $0x24] sm:$0xf]
      %v331 = vld [vmem:[%s1 + $0x28] sm:$0xf]
      %v332 = vld [vmem:[%s1 + $0x2c] sm:$0xf]
      %v333 = vld [vmem:[%s1 + $0x30] sm:$0xf]
      %v334 = vld [vmem:[%s1 + $0x34] sm:$0xf]
      %v335 = vld [vmem:[%s1 + $0x38] sm:$0xf]
      %v336 = vld [vmem:[%s1 + $0x3c] sm:$0xf]
      %v337 = vld [vmem:[%s1 + $0x40] sm:$0xf]
      %v338 = vld [vmem:[%s1 + $0x44] sm:$0xf]
      %v339 = vld [vmem:[%s1 + $0x48] sm:$0xf]
      %v340 = vld [vmem:[%s1 + $0x4c] sm:$0xf]
      %v341 = vld [vmem:[%s1 + $0x50] sm:$0xf]
      %v342 = vld [vmem:[%s1 + $0x54] sm:$0xf]
      %v343 = vld [vmem:[%s1 + $0x58] sm:$0xf]
      %v344 = vld [vmem:[%s1 + $0x5c] sm:$0xf]
      %v345 = vld [vmem:[%s1 + $0x60] sm:$0xf]
      %v346 = vld [vmem:[%s1 + $0x64] sm:$0xf]
      %v347 = vld [vmem:[%s1 + $0x68] sm:$0xf]
      %v348 = vld [vmem:[%s1 + $0x6c] sm:$0xf]
      %v349 = vld [vmem:[%s1 + $0x70] sm:$0xf]
      %v350 = vld [vmem:[%s1 + $0x74] sm:$0xf]
      %v351 = vld [vmem:[%s1 + $0x78] sm:$0xf]
      %v352 = vld [vmem:[%s1 + $0x7c] sm:$0xf]
      %v353 = vld [vmem:[%s1 + $0x80] sm:$0xf]
      %v354 = vld [vmem:[%s1 + $0x84] sm:$0xf]
      %v355 = vld [vmem:[%s1 + $0x88] sm:$0xf]
      %v356 = vld [vmem:[%s1 + $0x8c] sm:$0xf]
      %v357 = vld [vmem:[%s1 + $0x90] sm:$0xf]
      %v358 = vld [vmem:[%s1 + $0x94] sm:$0xf]
      %v359 = vld [vmem:[%s1 + $0x98] sm:$0xf]
      %v360 = vld [vmem:[%s1 + $0x9c] sm:$0xf]
      %v361 = vld [vmem:[%s1 + $0xa0] sm:$0xf]
      %v362 = vld [vmem:[%s1 + $0xa4] sm:$0xf]
      %v363 = vld [vmem:[%s1 + $0xa8] sm:$0xf]
      %v364 = vld [vmem:[%s1 + $0xac] sm:$0xf]
      %v365 = vld [vmem:[%s1 + $0xb0] sm:$0xf]
      %v366 = vld [vmem:[%s1 + $0xb4] sm:$0xf]
      %v367 = vld [vmem:[%s1 + $0xb8] sm:$0xf]
      %v368 = vld [vmem:[%s1 + $0xbc] sm:$0xf]
      %v369 = vld [vmem:[%s1 + $0xc0] sm:$0xf]
      %v370 = vld [vmem:[%s1 + $0xc4] sm:$0xf]
      %v371 = vld [vmem:[%s1 + $0xc8] sm:$0xf]
      %v372 = vld [vmem:[%s1 + $0xcc] sm:$0xf]
      %v373 = vld [vmem:[%s1 + $0xd0] sm:$0xf]
      %v374 = vld [vmem:[%s1 + $0xd4] sm:$0xf]
      %v375 = vld [vmem:[%s1 + $0xd8] sm:$0xf]
      %v376 = vld [vmem:[%s1 + $0xdc] sm:$0xf]
      %v377 = vld [vmem:[%s1 + $0xe0] sm:$0xf]
      %v378 = vld [vmem:[%s1 + $0xe4] sm:$0xf]
      %v379 = vld [vmem:[%s1 + $0xe8] sm:$0xf]
      %v380 = vld [vmem:[%s1 + $0xec] sm:$0xf]
      %v381 = vld [vmem:[%s1 + $0xf0] sm:$0xf]
      %v382 = vld [vmem:[%s1 + $0xf4] sm:$0xf]
      %v383 = vld [vmem:[%s1 + $0xf8] sm:$0xf]
      %v384 = vld [vmem:[%s1 + $0xfc] sm:$0xf]
      %v385 = vld [vmem:[%s1 + $0x100] sm:$0xf]
      %v386 = vld [vmem:[%s1 + $0x104] sm:$0xf]
      %v387 = vld [vmem:[%s1 + $0x108] sm:$0xf]
      %v388 = vld [vmem:[%s1 + $0x10c] sm:$0xf]
      %v389 = vld [vmem:[%s1 + $0x110] sm:$0xf]
      %v390 = vld [vmem:[%s1 + $0x114] sm:$0xf]
      %v391 = vld [vmem:[%s1 + $0x118] sm:$0xf]
      %v392 = vld [vmem:[%s1 + $0x11c] sm:$0xf]
      %v393 = vld [vmem:[%s1 + $0x120] sm:$0xf]
      %v394 = vld [vmem:[%s1 + $0x124] sm:$0xf]
      %v395 = vld [vmem:[%s1 + $0x128] sm:$0xf]
      %v396 = vld [vmem:[%s1 + $0x12c] sm:$0xf]
      %v397 = vld [vmem:[%s1 + $0x130] sm:$0xf]
      %v398 = vld [vmem:[%s1 + $0x134] sm:$0xf]
      %v399 = vld [vmem:[%s1 + $0x138] sm:$0xf]
      %v400 = vld [vmem:[%s1 + $0x13c] sm:$0xf]
      %v401 = vld [vmem:[%s1 + $0x140] sm:$0xf]
      %v402 = vld [vmem:[%s1 + $0x144] sm:$0xf]
      %v403 = vld [vmem:[%s1 + $0x148] sm:$0xf]
      %v404 = vld [vmem:[%s1 + $0x14c] sm:$0xf]
      %v405 = vld [vmem:[%s1 + $0x150] sm:$0xf]
      %v406 = vld [vmem:[%s1 + $0x154] sm:$0xf]
      %v407 = vld [vmem:[%s1 + $0x158] sm:$0xf]
      %v408 = vld [vmem:[%s1 + $0x15c] sm:$0xf]
      %v409 = vld [vmem:[%s1 + $0x160] sm:$0xf]
      %v410 = vld [vmem:[%s1 + $0x164] sm:$0xf]
      %v411 = vld [vmem:[%s1 + $0x168] sm:$0xf]
      %v412 = vld [vmem:[%s1 + $0x16c] sm:$0xf]
      %v413 = vld [vmem:[%s1 + $0x170] sm:$0xf]
      %v414 = vld [vmem:[%s1 + $0x174] sm:$0xf]
      %v415 = vld [vmem:[%s1 + $0x178] sm:$0xf]
      %v416 = vld [vmem:[%s1 + $0x17c] sm:$0xf]
      %v417 = vld [vmem:[%s1 + $0x180] sm:$0xf]
      %v418 = vld [vmem:[%s1 + $0x184] sm:$0xf]
      %v419 = vld [vmem:[%s1 + $0x188] sm:$0xf]
      %v420 = vld [vmem:[%s1 + $0x18c] sm:$0xf]
      %v421 = vld [vmem:[%s1 + $0x190] sm:$0xf]
      %v422 = vld [vmem:[%s1 + $0x194] sm:$0xf]
      %v423 = vld [vmem:[%s1 + $0x198] sm:$0xf]
      %v424 = vld [vmem:[%s1 + $0x19c] sm:$0xf]
      %v425 = vld [vmem:[%s1 + $0x1a0] sm:$0xf]
      %v426 = vld [vmem:[%s1 + $0x1a4] sm:$0xf]
      %v427 = vld [vmem:[%s1 + $0x1a8] sm:$0xf]
      %v428 = vld [vmem:[%s1 + $0x1ac] sm:$0xf]
      %v429 = vld [vmem:[%s1 + $0x1b0] sm:$0xf]
      %v430 = vld [vmem:[%s1 + $0x1b4] sm:$0xf]
      %v431 = vld [vmem:[%s1 + $0x1b8] sm:$0xf]
      %v432 = vld [vmem:[%s1 + $0x1bc] sm:$0xf]
      %v433 = vld [vmem:[%s2] sm:$0x1]
      %v435 = vperm.slane %v433, 0
      %v549 = vunpack.c.l.b16 %v321
      %v550 = vunpack.c.l.b16 %v322
      %v551 = vunpack.c.l.b16 %v323
      %v552 = vunpack.c.l.b16 %v324
      %v553 = vunpack.c.l.b16 %v325
      %v554 = vunpack.c.l.b16 %v326
      %v555 = vunpack.c.l.b16 %v327
      %v556 = vunpack.c.l.b16 %v328
      %v557 = vunpack.c.l.b16 %v329
      %v558 = vunpack.c.l.b16 %v330
      %v559 = vunpack.c.l.b16 %v331
      %v560 = vunpack.c.l.b16 %v332
      %v561 = vunpack.c.l.b16 %v333
      %v562 = vunpack.c.l.b16 %v334
      %v563 = vunpack.c.l.b16 %v335
      %v564 = vunpack.c.l.b16 %v336
      %v565 = vunpack.c.l.b16 %v337
      %v566 = vunpack.c.l.b16 %v338
      %v567 = vunpack.c.l.b16 %v339
      %v568 = vunpack.c.l.b16 %v340
      %v569 = vunpack.c.l.b16 %v341
      %v570 = vunpack.c.l.b16 %v342
      %v571 = vunpack.c.l.b16 %v343
      %v572 = vunpack.c.l.b16 %v344
      %v573 = vunpack.c.l.b16 %v345
      %v574 = vunpack.c.l.b16 %v346
      %v575 = vunpack.c.l.b16 %v347
      %v576 = vunpack.c.l.b16 %v348
      %v577 = vunpack.c.l.b16 %v349
      %v578 = vunpack.c.l.b16 %v350
      %v579 = vunpack.c.l.b16 %v351
      %v580 = vunpack.c.l.b16 %v352
      %v581 = vunpack.c.l.b16 %v353
      %v582 = vunpack.c.l.b16 %v354
      %v583 = vunpack.c.l.b16 %v355
      %v584 = vunpack.c.l.b16 %v356
      %v585 = vunpack.c.l.b16 %v357
      %v586 = vunpack.c.l.b16 %v358
      %v587 = vunpack.c.l.b16 %v359
      %v588 = vunpack.c.l.b16 %v360
      %v589 = vunpack.c.l.b16 %v361
      %v590 = vunpack.c.l.b16 %v362
      %v591 = vunpack.c.l.b16 %v363
      %v592 = vunpack.c.l.b16 %v364
      %v593 = vunpack.c.l.b16 %v365
      %v594 = vunpack.c.l.b16 %v366
      %v595 = vunpack.c.l.b16 %v367
      %v596 = vunpack.c.l.b16 %v368
      %v597 = vunpack.c.l.b16 %v369
      %v598 = vunpack.c.l.b16 %v370
      %v599 = vunpack.c.l.b16 %v371
      %v600 = vunpack.c.l.b16 %v372
      %v601 = vunpack.c.l.b16 %v373
      %v602 = vunpack.c.l.b16 %v374
      %v603 = vunpack.c.l.b16 %v375
      %v604 = vunpack.c.l.b16 %v376
      %v605 = vunpack.c.l.b16 %v377
      %v606 = vunpack.c.l.b16 %v378
      %v607 = vunpack.c.l.b16 %v379
      %v608 = vunpack.c.l.b16 %v380
      %v609 = vunpack.c.l.b16 %v381
      %v610 = vunpack.c.l.b16 %v382
      %v611 = vunpack.c.l.b16 %v383
      %v612 = vunpack.c.l.b16 %v384
      %v613 = vunpack.c.l.b16 %v385
      %v614 = vunpack.c.l.b16 %v386
      %v615 = vunpack.c.l.b16 %v387
      %v616 = vunpack.c.l.b16 %v388
      %v617 = vunpack.c.l.b16 %v389
      %v618 = vunpack.c.l.b16 %v390
      %v619 = vunpack.c.l.b16 %v391
      %v620 = vunpack.c.l.b16 %v392
      %v621 = vunpack.c.l.b16 %v393
      %v622 = vunpack.c.l.b16 %v394
      %v623 = vunpack.c.l.b16 %v395
      %v624 = vunpack.c.l.b16 %v396
      %v625 = vunpack.c.l.b16 %v397
      %v626 = vunpack.c.l.b16 %v398
      %v627 = vunpack.c.l.b16 %v399
      %v628 = vunpack.c.l.b16 %v400
      %v629 = vunpack.c.l.b16 %v401
      %v630 = vunpack.c.l.b16 %v402
      %v631 = vunpack.c.l.b16 %v403
      %v632 = vunpack.c.l.b16 %v404
      %v633 = vunpack.c.l.b16 %v405
      %v634 = vunpack.c.l.b16 %v406
      %v635 = vunpack.c.l.b16 %v407
      %v636 = vunpack.c.l.b16 %v408
      %v637 = vunpack.c.l.b16 %v409
      %v638 = vunpack.c.l.b16 %v410
      %v639 = vunpack.c.l.b16 %v411
      %v640 = vunpack.c.l.b16 %v412
      %v641 = vunpack.c.l.b16 %v413
      %v642 = vunpack.c.l.b16 %v414
      %v643 = vunpack.c.l.b16 %v415
      %v644 = vunpack.c.l.b16 %v416
      %v645 = vunpack.c.l.b16 %v417
      %v646 = vunpack.c.l.b16 %v418
      %v647 = vunpack.c.l.b16 %v419
      %v648 = vunpack.c.l.b16 %v420
      %v649 = vunpack.c.l.b16 %v421
      %v650 = vunpack.c.l.b16 %v422
      %v651 = vunpack.c.l.b16 %v423
      %v652 = vunpack.c.l.b16 %v424
      %v653 = vunpack.c.l.b16 %v425
      %v654 = vunpack.c.l.b16 %v426
      %v655 = vunpack.c.l.b16 %v427
      %v656 = vunpack.c.l.b16 %v428
      %v657 = vunpack.c.l.b16 %v429
      %v658 = vunpack.c.l.b16 %v430
      %v659 = vunpack.c.l.b16 %v431
      %v660 = vunpack.c.l.b16 %v432
      %v661 = vpack.c.b16 %v550, %v549
      %v662 = vpack.c.b16 %v552, %v551
      %v663 = vpack.c.b16 %v554, %v553
      %v664 = vpack.c.b16 %v556, %v555
      %v665 = vpack.c.b16 %v558, %v557
      %v666 = vpack.c.b16 %v560, %v559
      %v667 = vpack.c.b16 %v562, %v561
      %v668 = vpack.c.b16 %v564, %v563
      %v669 = vpack.c.b16 %v566, %v565
      %v670 = vpack.c.b16 %v568, %v567
      %v671 = vpack.c.b16 %v570, %v569
      %v672 = vpack.c.b16 %v572, %v571
      %v673 = vpack.c.b16 %v574, %v573
      %v674 = vpack.c.b16 %v576, %v575
      %v675 = vpack.c.b16 %v578, %v577
      %v676 = vpack.c.b16 %v580, %v579
      %v677 = vpack.c.b16 %v582, %v581
      %v678 = vpack.c.b16 %v584, %v583
      %v679 = vpack.c.b16 %v586, %v585
      %v680 = vpack.c.b16 %v588, %v587
      %v681 = vpack.c.b16 %v590, %v589
      %v682 = vpack.c.b16 %v592, %v591
      %v683 = vpack.c.b16 %v594, %v593
      %v684 = vpack.c.b16 %v596, %v595
      %v685 = vpack.c.b16 %v598, %v597
      %v686 = vpack.c.b16 %v600, %v599
      %v687 = vpack.c.b16 %v602, %v601
      %v688 = vpack.c.b16 %v604, %v603
      %v689 = vpack.c.b16 %v606, %v605
      %v690 = vpack.c.b16 %v608, %v607
      %v691 = vpack.c.b16 %v610, %v609
      %v692 = vpack.c.b16 %v612, %v611
      %v693 = vpack.c.b16 %v614, %v613
      %v694 = vpack.c.b16 %v616, %v615
      %v695 = vpack.c.b16 %v618, %v617
      %v696 = vpack.c.b16 %v620, %v619
      %v697 = vpack.c.b16 %v622, %v621
      %v698 = vpack.c.b16 %v624, %v623
      %v699 = vpack.c.b16 %v626, %v625
      %v700 = vpack.c.b16 %v628, %v627
      %v701 = vpack.c.b16 %v630, %v629
      %v702 = vpack.c.b16 %v632, %v631
      %v703 = vpack.c.b16 %v634, %v633
      %v704 = vpack.c.b16 %v636, %v635
      %v705 = vpack.c.b16 %v638, %v637
      %v706 = vpack.c.b16 %v640, %v639
      %v707 = vpack.c.b16 %v642, %v641
      %v708 = vpack.c.b16 %v644, %v643
      %v709 = vpack.c.b16 %v646, %v645
      %v710 = vpack.c.b16 %v648, %v647
      %v711 = vpack.c.b16 %v650, %v649
      %v712 = vpack.c.b16 %v652, %v651
      %v713 = vpack.c.b16 %v654, %v653
      %v714 = vpack.c.b16 %v656, %v655
      %v715 = vpack.c.b16 %v658, %v657
      %v716 = vpack.c.b16 %v660, %v659
      %773 = vmatpush.bf16.msra.mxu0 %v668
      %774 = vmatpush.bf16.msra.mxu0 %v667
      %775 = vmatpush.bf16.msra.mxu0 %v666
      %776 = vmatpush.bf16.msra.mxu0 %v665
      %777 = vmatpush.bf16.msra.mxu0 %v664
      %778 = vmatpush.bf16.msra.mxu0 %v663
      %779 = vmatpush.bf16.msra.mxu0 %v662
      %780 = vmatpush.bf16.msra.mxu0 %v661
      %781 = vmatmul.bf16.gmra.mxu0 %v307
      %v782 = vpop.f32.mrf.mxu0
      %v783 = vadd.f32 %v435, %v782
      %v784 = vpop.f32.mrf.mxu0
      %v785 = vadd.f32 %v435, %v784
      %786 = vmatmul.bf16.gmra.mxu0 %v314
      %v787 = vpop.f32.mrf.mxu0
      %v788 = vadd.f32 %v435, %v787
      %v789 = vpop.f32.mrf.mxu0
      %v790 = vadd.f32 %v435, %v789
      %791 = vdwg.mxu0
      %792 = vmatpush.bf16.msra.mxu0 %v676
      %793 = vmatpush.bf16.msra.mxu0 %v675
      %794 = vmatpush.bf16.msra.mxu0 %v674
      %795 = vmatpush.bf16.msra.mxu0 %v673
      %796 = vmatpush.bf16.msra.mxu0 %v672
      %797 = vmatpush.bf16.msra.mxu0 %v671
      %798 = vmatpush.bf16.msra.mxu0 %v670
      %799 = vmatpush.bf16.msra.mxu0 %v669
      %800 = vmatmul.bf16.gmra.mxu0 %v308
      %v801 = vpop.f32.mrf.mxu0
      %v802 = vadd.f32 %v783, %v801
      %v803 = vpop.f32.mrf.mxu0
      %v804 = vadd.f32 %v785, %v803
      %805 = vmatmul.bf16.gmra.mxu0 %v315
      %v806 = vpop.f32.mrf.mxu0
      %v807 = vadd.f32 %v788, %v806
      %v808 = vpop.f32.mrf.mxu0
      %v809 = vadd.f32 %v790, %v808
      %810 = vdwg.mxu0
      %811 = vmatpush.bf16.msra.mxu0 %v684
      %812 = vmatpush.bf16.msra.mxu0 %v683
      %813 = vmatpush.bf16.msra.mxu0 %v682
      %814 = vmatpush.bf16.msra.mxu0 %v681
      %815 = vmatpush.bf16.msra.mxu0 %v680
      %816 = vmatpush.bf16.msra.mxu0 %v679
      %817 = vmatpush.bf16.msra.mxu0 %v678
      %818 = vmatpush.bf16.msra.mxu0 %v677
      %819 = vmatmul.bf16.gmra.mxu0 %v309
      %v820 = vpop.f32.mrf.mxu0
      %v821 = vadd.f32 %v802, %v820
      %v822 = vpop.f32.mrf.mxu0
      %v823 = vadd.f32 %v804, %v822
      %824 = vmatmul.bf16.gmra.mxu0 %v316
      %v825 = vpop.f32.mrf.mxu0
      %v826 = vadd.f32 %v807, %v825
      %v827 = vpop.f32.mrf.mxu0
      %v828 = vadd.f32 %v809, %v827
      %829 = vdwg.mxu0
      %830 = vmatpush.bf16.msra.mxu0 %v692
      %831 = vmatpush.bf16.msra.mxu0 %v691
      %832 = vmatpush.bf16.msra.mxu0 %v690
      %833 = vmatpush.bf16.msra.mxu0 %v689
      %834 = vmatpush.bf16.msra.mxu0 %v688
      %835 = vmatpush.bf16.msra.mxu0 %v687
      %836 = vmatpush.bf16.msra.mxu0 %v686
      %837 = vmatpush.bf16.msra.mxu0 %v685
      %838 = vmatmul.bf16.gmra.mxu0 %v310
      %v839 = vpop.f32.mrf.mxu0
      %v840 = vadd.f32 %v821, %v839
      %v841 = vpop.f32.mrf.mxu0
      %v842 = vadd.f32 %v823, %v841
      %843 = vmatmul.bf16.gmra.mxu0 %v317
      %v844 = vpop.f32.mrf.mxu0
      %v845 = vadd.f32 %v826, %v844
      %v846 = vpop.f32.mrf.mxu0
      %v847 = vadd.f32 %v828, %v846
      %848 = vdwg.mxu0
      %849 = vmatpush.bf16.msra.mxu0 %v700
      %850 = vmatpush.bf16.msra.mxu0 %v699
      %851 = vmatpush.bf16.msra.mxu0 %v698
      %852 = vmatpush.bf16.msra.mxu0 %v697
      %853 = vmatpush.bf16.msra.mxu0 %v696
      %854 = vmatpush.bf16.msra.mxu0 %v695
      %855 = vmatpush.bf16.msra.mxu0 %v694
      %856 = vmatpush.bf16.msra.mxu0 %v693
      %857 = vmatmul.bf16.gmra.mxu0 %v311
      %v858 = vpop.f32.mrf.mxu0
      %v859 = vadd.f32 %v840, %v858
      %v860 = vpop.f32.mrf.mxu0
      %v861 = vadd.f32 %v842, %v860
      %862 = vmatmul.bf16.gmra.mxu0 %v318
      %v863 = vpop.f32.mrf.mxu0
      %v864 = vadd.f32 %v845, %v863
      %v865 = vpop.f32.mrf.mxu0
      %v866 = vadd.f32 %v847, %v865
      %867 = vdwg.mxu0
      %868 = vmatpush.bf16.msra.mxu0 %v708
      %869 = vmatpush.bf16.msra.mxu0 %v707
      %870 = vmatpush.bf16.msra.mxu0 %v706
      %871 = vmatpush.bf16.msra.mxu0 %v705
      %872 = vmatpush.bf16.msra.mxu0 %v704
      %873 = vmatpush.bf16.msra.mxu0 %v703
      %874 = vmatpush.bf16.msra.mxu0 %v702
      %875 = vmatpush.bf16.msra.mxu0 %v701
      %876 = vmatmul.bf16.gmra.mxu0 %v312
      %v877 = vpop.f32.mrf.mxu0
      %v878 = vadd.f32 %v859, %v877
      %v879 = vpop.f32.mrf.mxu0
      %v880 = vadd.f32 %v861, %v879
      %881 = vmatmul.bf16.gmra.mxu0 %v319
      %v882 = vpop.f32.mrf.mxu0
      %v883 = vadd.f32 %v864, %v882
      %v884 = vpop.f32.mrf.mxu0
      %v885 = vadd.f32 %v866, %v884
      %886 = vdwg.mxu0
      %887 = vmatpush.bf16.msra.mxu0 %v716
      %888 = vmatpush.bf16.msra.mxu0 %v715
      %889 = vmatpush.bf16.msra.mxu0 %v714
      %890 = vmatpush.bf16.msra.mxu0 %v713
      %891 = vmatpush.bf16.msra.mxu0 %v712
      %892 = vmatpush.bf16.msra.mxu0 %v711
      %893 = vmatpush.bf16.msra.mxu0 %v710
      %894 = vmatpush.bf16.msra.mxu0 %v709
      %895 = vmatmul.bf16.gmra.mxu0 %v313
      %v896 = vpop.f32.mrf.mxu0
      %v897 = vadd.f32 %v878, %v896
      %v898 = vpop.f32.mrf.mxu0
      %v899 = vadd.f32 %v880, %v898
      %900 = vmatmul.bf16.gmra.mxu0 %v320
      %v901 = vpop.f32.mrf.mxu0
      %v902 = vadd.f32 %v883, %v901
      %v903 = vpop.f32.mrf.mxu0
      %v904 = vadd.f32 %v885, %v903
      %905 = vdwg.mxu0
      %vm906 = vcmp.ge.f32.partialorder %v897, 0.0
      %vm907 = vcmp.ge.f32.partialorder %v899, 0.0
      %vm908 = vcmp.ge.f32.partialorder %v902, 0.0
      %vm909 = vcmp.ge.f32.partialorder %v904, 0.0
      %v910 = vmul.f32 %v897, 0.2
      %v911 = vmul.f32 %v899, 0.2
      %v912 = vmul.f32 %v902, 0.2
      %v913 = vmul.f32 %v904, 0.2
      %v914 = vsel %vm906, %v897, %v910
      %v915 = vsel %vm907, %v899, %v911
      %v916 = vsel %vm908, %v902, %v912
      %v917 = vsel %vm909, %v904, %v913
      %vm920 = vcmask 1040384
      %v921 = vrot.slane %v914, 7
      %v922 = vrot.slane %v915, 7
      %v923 = vsel %vm920, %v921, %v922
      %v927 = vsel %vm920, 0.0, %v921
      %v928 = vsel %vm920, %v922, 0.0
      %929 = vst [vmem:[#allocation2] sm:$0xff] %v927
      %930 = vst [vmem:[#allocation2 + $0x8] sm:$0xff] %v923
      %931 = vst [vmem:[#allocation2 + $0x10] sm:$0x3] %v928
      %v934 = vrot.slane %v916, 7
      %v935 = vrot.slane %v917, 7
      %v936 = vsel %vm920, %v934, %v935
      %v940 = vsel %vm920, 0.0, %v934
      %v941 = vsel %vm920, %v935, 0.0
      %942 = vst [vmem:[#allocation2 + $0x12] sm:$0xff] %v940
      %943 = vst [vmem:[#allocation2 + $0x1a] sm:$0xff] %v936
      %944 = vst [vmem:[#allocation2 + $0x22] sm:$0x3] %v941
      %v945 = vld [vmem:[#allocation2] ss:$2 sm:$0xff]
      %s946 = scalar_lea.vmem [#allocation2], 1
      %v947 = vld [vmem:[%s946] ss:$2 sm:$0xff]
      %s948 = scalar_lea.vmem [#allocation2], 2
      %v949 = vld [vmem:[%s948] ss:$2 sm:$0xff]
      %s950 = scalar_lea.vmem [#allocation2], 18
      %v951 = vld [vmem:[%s950] ss:$2 sm:$0xff]
      %s952 = scalar_lea.vmem [#allocation2], 19
      %v953 = vld [vmem:[%s952] ss:$2 sm:$0xff]
      %s954 = scalar_lea.vmem [#allocation2], 20
      %v955 = vld [vmem:[%s954] ss:$2 sm:$0xff]
      %v956 = vpack.c.bf16 %v951, %v945
      %v957 = vpack.c.bf16 %v953, %v947
      %v958 = vpack.c.bf16 %v955, %v949
      %v959 = vld [vmem:[%s3] sm:$0xf]
      %v960 = vld [vmem:[%s3 + $0x4] sm:$0xf]
      %v961 = vld [vmem:[%s3 + $0x8] sm:$0xf]
      %v962 = vld [vmem:[%s3 + $0xc] sm:$0xf]
      %v963 = vld [vmem:[%s3 + $0x10] sm:$0xf]
      %v964 = vld [vmem:[%s3 + $0x14] sm:$0xf]
      %v965 = vld [vmem:[%s3 + $0x18] sm:$0xf]
      %v966 = vld [vmem:[%s3 + $0x1c] sm:$0xf]
      %v967 = vld [vmem:[%s3 + $0x20] sm:$0xf]
      %v968 = vld [vmem:[%s3 + $0x24] sm:$0xf]
      %v969 = vld [vmem:[%s3 + $0x28] sm:$0xf]
      %v970 = vld [vmem:[%s3 + $0x2c] sm:$0xf]
      %v971 = vld [vmem:[%s3 + $0x30] sm:$0xf]
      %v972 = vld [vmem:[%s3 + $0x34] sm:$0xf]
      %v973 = vld [vmem:[%s3 + $0x38] sm:$0xf]
      %v974 = vld [vmem:[%s3 + $0x3c] sm:$0xf]
      %v975 = vld [vmem:[%s3 + $0x40] sm:$0xf]
      %v976 = vld [vmem:[%s3 + $0x44] sm:$0xf]
      %v977 = vld [vmem:[%s3 + $0x48] sm:$0xf]
      %v978 = vld [vmem:[%s3 + $0x4c] sm:$0xf]
      %v979 = vld [vmem:[%s3 + $0x50] sm:$0xf]
      %v980 = vld [vmem:[%s3 + $0x54] sm:$0xf]
      %v981 = vld [vmem:[%s3 + $0x58] sm:$0xf]
      %v982 = vld [vmem:[%s3 + $0x5c] sm:$0xf]
      %v983 = vld [vmem:[%s3 + $0x60] sm:$0xf]
      %v984 = vld [vmem:[%s3 + $0x64] sm:$0xf]
      %v985 = vld [vmem:[%s3 + $0x68] sm:$0xf]
      %v986 = vld [vmem:[%s3 + $0x6c] sm:$0xf]
      %v987 = vld [vmem:[%s3 + $0x70] sm:$0xf]
      %v988 = vld [vmem:[%s3 + $0x74] sm:$0xf]
      %v989 = vld [vmem:[%s3 + $0x78] sm:$0xf]
      %v990 = vld [vmem:[%s3 + $0x7c] sm:$0xf]
      %v991 = vld [vmem:[%s3 + $0x80] sm:$0xf]
      %v992 = vld [vmem:[%s3 + $0x84] sm:$0xf]
      %v993 = vld [vmem:[%s3 + $0x88] sm:$0xf]
      %v994 = vld [vmem:[%s3 + $0x8c] sm:$0xf]
      %v995 = vld [vmem:[%s3 + $0x90] sm:$0xf]
      %v996 = vld [vmem:[%s3 + $0x94] sm:$0xf]
      %v997 = vld [vmem:[%s3 + $0x98] sm:$0xf]
      %v998 = vld [vmem:[%s3 + $0x9c] sm:$0xf]
      %v999 = vld [vmem:[%s3 + $0xa0] sm:$0xf]
      %v1000 = vld [vmem:[%s3 + $0xa4] sm:$0xf]
      %v1001 = vld [vmem:[%s3 + $0xa8] sm:$0xf]
      %v1002 = vld [vmem:[%s3 + $0xac] sm:$0xf]
      %v1003 = vld [vmem:[%s3 + $0xb0] sm:$0xf]
      %v1004 = vld [vmem:[%s3 + $0xb4] sm:$0xf]
      %v1005 = vld [vmem:[%s3 + $0xb8] sm:$0xf]
      %v1006 = vld [vmem:[%s3 + $0xbc] sm:$0xf]
      %v1007 = vld [vmem:[%s4] sm:$0x1]
      %v1009 = vperm.slane %v1007, 0
      %v1059 = vunpack.c.l.b16 %v959
      %v1060 = vunpack.c.l.b16 %v960
      %v1061 = vunpack.c.l.b16 %v961
      %v1062 = vunpack.c.l.b16 %v962
      %v1063 = vunpack.c.l.b16 %v963
      %v1064 = vunpack.c.l.b16 %v964
      %v1065 = vunpack.c.l.b16 %v965
      %v1066 = vunpack.c.l.b16 %v966
      %v1067 = vunpack.c.l.b16 %v967
      %v1068 = vunpack.c.l.b16 %v968
      %v1069 = vunpack.c.l.b16 %v969
      %v1070 = vunpack.c.l.b16 %v970
      %v1071 = vunpack.c.l.b16 %v971
      %v1072 = vunpack.c.l.b16 %v972
      %v1073 = vunpack.c.l.b16 %v973
      %v1074 = vunpack.c.l.b16 %v974
      %v1075 = vunpack.c.l.b16 %v975
      %v1076 = vunpack.c.l.b16 %v976
      %v1077 = vunpack.c.l.b16 %v977
      %v1078 = vunpack.c.l.b16 %v978
      %v1079 = vunpack.c.l.b16 %v979
      %v1080 = vunpack.c.l.b16 %v980
      %v1081 = vunpack.c.l.b16 %v981
      %v1082 = vunpack.c.l.b16 %v982
      %v1083 = vunpack.c.l.b16 %v983
      %v1084 = vunpack.c.l.b16 %v984
      %v1085 = vunpack.c.l.b16 %v985
      %v1086 = vunpack.c.l.b16 %v986
      %v1087 = vunpack.c.l.b16 %v987
      %v1088 = vunpack.c.l.b16 %v988
      %v1089 = vunpack.c.l.b16 %v989
      %v1090 = vunpack.c.l.b16 %v990
      %v1091 = vunpack.c.l.b16 %v991
      %v1092 = vunpack.c.l.b16 %v992
      %v1093 = vunpack.c.l.b16 %v993
      %v1094 = vunpack.c.l.b16 %v994
      %v1095 = vunpack.c.l.b16 %v995
      %v1096 = vunpack.c.l.b16 %v996
      %v1097 = vunpack.c.l.b16 %v997
      %v1098 = vunpack.c.l.b16 %v998
      %v1099 = vunpack.c.l.b16 %v999
      %v1100 = vunpack.c.l.b16 %v1000
      %v1101 = vunpack.c.l.b16 %v1001
      %v1102 = vunpack.c.l.b16 %v1002
      %v1103 = vunpack.c.l.b16 %v1003
      %v1104 = vunpack.c.l.b16 %v1004
      %v1105 = vunpack.c.l.b16 %v1005
      %v1106 = vunpack.c.l.b16 %v1006
      %v1107 = vpack.c.b16 %v1060, %v1059
      %v1108 = vpack.c.b16 %v1062, %v1061
      %v1109 = vpack.c.b16 %v1064, %v1063
      %v1110 = vpack.c.b16 %v1066, %v1065
      %v1111 = vpack.c.b16 %v1068, %v1067
      %v1112 = vpack.c.b16 %v1070, %v1069
      %v1113 = vpack.c.b16 %v1072, %v1071
      %v1114 = vpack.c.b16 %v1074, %v1073
      %v1115 = vpack.c.b16 %v1076, %v1075
      %v1116 = vpack.c.b16 %v1078, %v1077
      %v1117 = vpack.c.b16 %v1080, %v1079
      %v1118 = vpack.c.b16 %v1082, %v1081
      %v1119 = vpack.c.b16 %v1084, %v1083
      %v1120 = vpack.c.b16 %v1086, %v1085
      %v1121 = vpack.c.b16 %v1088, %v1087
      %v1122 = vpack.c.b16 %v1090, %v1089
      %v1123 = vpack.c.b16 %v1092, %v1091
      %v1124 = vpack.c.b16 %v1094, %v1093
      %v1125 = vpack.c.b16 %v1096, %v1095
      %v1126 = vpack.c.b16 %v1098, %v1097
      %v1127 = vpack.c.b16 %v1100, %v1099
      %v1128 = vpack.c.b16 %v1102, %v1101
      %v1129 = vpack.c.b16 %v1104, %v1103
      %v1130 = vpack.c.b16 %v1106, %v1105
      %1155 = vmatpush.bf16.msra.mxu0 %v1114
      %1156 = vmatpush.bf16.msra.mxu0 %v1113
      %1157 = vmatpush.bf16.msra.mxu0 %v1112
      %1158 = vmatpush.bf16.msra.mxu0 %v1111
      %1159 = vmatpush.bf16.msra.mxu0 %v1110
      %1160 = vmatpush.bf16.msra.mxu0 %v1109
      %1161 = vmatpush.bf16.msra.mxu0 %v1108
      %1162 = vmatpush.bf16.msra.mxu0 %v1107
      %1163 = vmatmul.bf16.gmra.mxu0 %v956
      %v1164 = vpop.f32.mrf.mxu0
      %v1165 = vadd.f32 %v1009, %v1164
      %v1166 = vpop.f32.mrf.mxu0
      %v1167 = vadd.f32 %v1009, %v1166
      %1168 = vdwg.mxu0
      %1169 = vmatpush.bf16.msra.mxu0 %v1122
      %1170 = vmatpush.bf16.msra.mxu0 %v1121
      %1171 = vmatpush.bf16.msra.mxu0 %v1120
      %1172 = vmatpush.bf16.msra.mxu0 %v1119
      %1173 = vmatpush.bf16.msra.mxu0 %v1118
      %1174 = vmatpush.bf16.msra.mxu0 %v1117
      %1175 = vmatpush.bf16.msra.mxu0 %v1116
      %1176 = vmatpush.bf16.msra.mxu0 %v1115
      %1177 = vmatmul.bf16.gmra.mxu0 %v957
      %v1178 = vpop.f32.mrf.mxu0
      %v1179 = vadd.f32 %v1165, %v1178
      %v1180 = vpop.f32.mrf.mxu0
      %v1181 = vadd.f32 %v1167, %v1180
      %1182 = vdwg.mxu0
      %1183 = vmatpush.bf16.msra.mxu0 %v1130
      %1184 = vmatpush.bf16.msra.mxu0 %v1129
      %1185 = vmatpush.bf16.msra.mxu0 %v1128
      %1186 = vmatpush.bf16.msra.mxu0 %v1127
      %1187 = vmatpush.bf16.msra.mxu0 %v1126
      %1188 = vmatpush.bf16.msra.mxu0 %v1125
      %1189 = vmatpush.bf16.msra.mxu0 %v1124
      %1190 = vmatpush.bf16.msra.mxu0 %v1123
      %1191 = vmatmul.bf16.gmra.mxu0 %v958
      %v1192 = vpop.f32.mrf.mxu0
      %v1193 = vadd.f32 %v1179, %v1192
      %v1194 = vpop.f32.mrf.mxu0
      %v1195 = vadd.f32 %v1181, %v1194
      %1196 = vdwg.mxu0
      %vm1197 = vcmp.ge.f32.partialorder %v1193, 0.0
      %vm1198 = vcmp.ge.f32.partialorder %v1195, 0.0
      %v1199 = vmul.f32 %v1193, 0.2
      %v1200 = vmul.f32 %v1195, 0.2
      %v1201 = vsel %vm1197, %v1193, %v1199
      %v1202 = vsel %vm1198, %v1195, %v1200
      %v1204 = vrot.slane %v1201, 7
      %v1206 = vsel %vm920, 0.0, %v1204
      %v1207 = vsel %vm920, %v1204, 0.0
      %1208 = vst [vmem:[#allocation3] sm:$0xff] %v1206
      %1209 = vst [vmem:[#allocation3 + $0x8] sm:$0x3] %v1207
      %v1211 = vrot.slane %v1202, 7
      %v1213 = vsel %vm920, 0.0, %v1211
      %v1214 = vsel %vm920, %v1211, 0.0
      %1215 = vst [vmem:[#allocation3 + $0xa] sm:$0xff] %v1213
      %1216 = vst [vmem:[#allocation3 + $0x12] sm:$0x3] %v1214
      %v1217 = vld [vmem:[#allocation3] ss:$2 sm:$0xf]
      %s1218 = scalar_lea.vmem [#allocation3], 1
      %v1219 = vld [vmem:[%s1218] ss:$2 sm:$0xf]
      %s1220 = scalar_lea.vmem [#allocation3], 2
      %v1221 = vld [vmem:[%s1220] ss:$2 sm:$0xf]
      %s1222 = scalar_lea.vmem [#allocation3], 10
      %v1223 = vld [vmem:[%s1222] ss:$2 sm:$0xf]
      %s1224 = scalar_lea.vmem [#allocation3], 11
      %v1225 = vld [vmem:[%s1224] ss:$2 sm:$0xf]
      %s1226 = scalar_lea.vmem [#allocation3], 12
      %v1227 = vld [vmem:[%s1226] ss:$2 sm:$0xf]
      %v1231 = vrot.slane %v1223, 4
      %v1232 = vrot.slane %v1225, 4
      %v1233 = vrot.slane %v1227, 4
      %vm1237 = vcmask 1043456
      %v1238 = vsel %vm1237, %v1217, %v1231
      %v1239 = vsel %vm1237, %v1219, %v1232
      %v1240 = vsel %vm1237, %v1221, %v1233
      %v1241 = vpack.c.bf16 %v1238, %v1238
      %v1242 = vpack.c.bf16 %v1239, %v1239
      %v1243 = vpack.c.bf16 %v1240, %v1240
      %v1244 = vld [vmem:[%s5] sm:$0xf]
      %v1245 = vld [vmem:[%s5 + $0x4] sm:$0xf]
      %v1246 = vld [vmem:[%s5 + $0x8] sm:$0xf]
      %v1247 = vld [vmem:[%s5 + $0xc] sm:$0xf]
      %v1248 = vld [vmem:[%s5 + $0x10] sm:$0xf]
      %v1249 = vld [vmem:[%s5 + $0x14] sm:$0xf]
      %v1250 = vld [vmem:[%s5 + $0x18] sm:$0xf]
      %v1251 = vld [vmem:[%s5 + $0x1c] sm:$0xf]
      %v1252 = vld [vmem:[%s5 + $0x20] sm:$0xf]
      %v1253 = vld [vmem:[%s5 + $0x24] sm:$0xf]
      %v1254 = vld [vmem:[%s5 + $0x28] sm:$0xf]
      %v1255 = vld [vmem:[%s5 + $0x2c] sm:$0xf]
      %v1256 = vld [vmem:[%s5 + $0x30] sm:$0xf]
      %v1257 = vld [vmem:[%s5 + $0x34] sm:$0xf]
      %v1258 = vld [vmem:[%s5 + $0x38] sm:$0xf]
      %v1259 = vld [vmem:[%s5 + $0x3c] sm:$0xf]
      %v1260 = vld [vmem:[%s5 + $0x40] sm:$0xf]
      %v1261 = vld [vmem:[%s5 + $0x44] sm:$0xf]
      %v1262 = vld [vmem:[%s5 + $0x48] sm:$0xf]
      %v1263 = vld [vmem:[%s5 + $0x4c] sm:$0xf]
      %v1264 = vld [vmem:[%s5 + $0x50] sm:$0xf]
      %v1265 = vld [vmem:[%s5 + $0x54] sm:$0xf]
      %v1266 = vld [vmem:[%s5 + $0x58] sm:$0xf]
      %v1267 = vld [vmem:[%s5 + $0x5c] sm:$0xf]
      %v1268 = vld [vmem:[%s5 + $0x60] sm:$0xf]
      %v1269 = vld [vmem:[%s5 + $0x64] sm:$0xf]
      %v1270 = vld [vmem:[%s5 + $0x68] sm:$0xf]
      %v1271 = vld [vmem:[%s5 + $0x6c] sm:$0xf]
      %v1272 = vld [vmem:[%s5 + $0x70] sm:$0xf]
      %v1273 = vld [vmem:[%s5 + $0x74] sm:$0xf]
      %v1274 = vld [vmem:[%s5 + $0x78] sm:$0xf]
      %v1275 = vld [vmem:[%s5 + $0x7c] sm:$0xf]
      %v1276 = vld [vmem:[%s5 + $0x80] sm:$0xf]
      %v1277 = vld [vmem:[%s5 + $0x84] sm:$0xf]
      %v1278 = vld [vmem:[%s5 + $0x88] sm:$0xf]
      %v1279 = vld [vmem:[%s5 + $0x8c] sm:$0xf]
      %v1280 = vld [vmem:[%s5 + $0x90] sm:$0xf]
      %v1281 = vld [vmem:[%s5 + $0x94] sm:$0xf]
      %v1282 = vld [vmem:[%s5 + $0x98] sm:$0xf]
      %v1283 = vld [vmem:[%s5 + $0x9c] sm:$0xf]
      %v1284 = vld [vmem:[%s5 + $0xa0] sm:$0xf]
      %v1285 = vld [vmem:[%s5 + $0xa4] sm:$0xf]
      %v1286 = vld [vmem:[%s5 + $0xa8] sm:$0xf]
      %v1287 = vld [vmem:[%s5 + $0xac] sm:$0xf]
      %v1288 = vld [vmem:[%s5 + $0xb0] sm:$0xf]
      %v1289 = vld [vmem:[%s5 + $0xb4] sm:$0xf]
      %v1290 = vld [vmem:[%s5 + $0xb8] sm:$0xf]
      %v1291 = vld [vmem:[%s5 + $0xbc] sm:$0xf]
      %v1292 = vld [vmem:[%s6] sm:$0x1]
      %v1294 = vperm.slane %v1292, 0
      %v1344 = vunpack.c.l.b16 %v1244
      %v1345 = vunpack.c.l.b16 %v1245
      %v1346 = vunpack.c.l.b16 %v1246
      %v1347 = vunpack.c.l.b16 %v1247
      %v1348 = vunpack.c.l.b16 %v1248
      %v1349 = vunpack.c.l.b16 %v1249
      %v1350 = vunpack.c.l.b16 %v1250
      %v1351 = vunpack.c.l.b16 %v1251
      %v1352 = vunpack.c.l.b16 %v1252
      %v1353 = vunpack.c.l.b16 %v1253
      %v1354 = vunpack.c.l.b16 %v1254
      %v1355 = vunpack.c.l.b16 %v1255
      %v1356 = vunpack.c.l.b16 %v1256
      %v1357 = vunpack.c.l.b16 %v1257
      %v1358 = vunpack.c.l.b16 %v1258
      %v1359 = vunpack.c.l.b16 %v1259
      %v1360 = vunpack.c.l.b16 %v1260
      %v1361 = vunpack.c.l.b16 %v1261
      %v1362 = vunpack.c.l.b16 %v1262
      %v1363 = vunpack.c.l.b16 %v1263
      %v1364 = vunpack.c.l.b16 %v1264
      %v1365 = vunpack.c.l.b16 %v1265
      %v1366 = vunpack.c.l.b16 %v1266
      %v1367 = vunpack.c.l.b16 %v1267
      %v1368 = vunpack.c.l.b16 %v1268
      %v1369 = vunpack.c.l.b16 %v1269
      %v1370 = vunpack.c.l.b16 %v1270
      %v1371 = vunpack.c.l.b16 %v1271
      %v1372 = vunpack.c.l.b16 %v1272
      %v1373 = vunpack.c.l.b16 %v1273
      %v1374 = vunpack.c.l.b16 %v1274
      %v1375 = vunpack.c.l.b16 %v1275
      %v1376 = vunpack.c.l.b16 %v1276
      %v1377 = vunpack.c.l.b16 %v1277
      %v1378 = vunpack.c.l.b16 %v1278
      %v1379 = vunpack.c.l.b16 %v1279
      %v1380 = vunpack.c.l.b16 %v1280
      %v1381 = vunpack.c.l.b16 %v1281
      %v1382 = vunpack.c.l.b16 %v1282
      %v1383 = vunpack.c.l.b16 %v1283
      %v1384 = vunpack.c.l.b16 %v1284
      %v1385 = vunpack.c.l.b16 %v1285
      %v1386 = vunpack.c.l.b16 %v1286
      %v1387 = vunpack.c.l.b16 %v1287
      %v1388 = vunpack.c.l.b16 %v1288
      %v1389 = vunpack.c.l.b16 %v1289
      %v1390 = vunpack.c.l.b16 %v1290
      %v1391 = vunpack.c.l.b16 %v1291
      %v1392 = vpack.c.b16 %v1345, %v1344
      %v1393 = vpack.c.b16 %v1347, %v1346
      %v1394 = vpack.c.b16 %v1349, %v1348
      %v1395 = vpack.c.b16 %v1351, %v1350
      %v1396 = vpack.c.b16 %v1353, %v1352
      %v1397 = vpack.c.b16 %v1355, %v1354
      %v1398 = vpack.c.b16 %v1357, %v1356
      %v1399 = vpack.c.b16 %v1359, %v1358
      %v1400 = vpack.c.b16 %v1361, %v1360
      %v1401 = vpack.c.b16 %v1363, %v1362
      %v1402 = vpack.c.b16 %v1365, %v1364
      %v1403 = vpack.c.b16 %v1367, %v1366
      %v1404 = vpack.c.b16 %v1369, %v1368
      %v1405 = vpack.c.b16 %v1371, %v1370
      %v1406 = vpack.c.b16 %v1373, %v1372
      %v1407 = vpack.c.b16 %v1375, %v1374
      %v1408 = vpack.c.b16 %v1377, %v1376
      %v1409 = vpack.c.b16 %v1379, %v1378
      %v1410 = vpack.c.b16 %v1381, %v1380
      %v1411 = vpack.c.b16 %v1383, %v1382
      %v1412 = vpack.c.b16 %v1385, %v1384
      %v1413 = vpack.c.b16 %v1387, %v1386
      %v1414 = vpack.c.b16 %v1389, %v1388
      %v1415 = vpack.c.b16 %v1391, %v1390
      %1440 = vmatpush.bf16.msra.mxu0 %v1399
      %1441 = vmatpush.bf16.msra.mxu0 %v1398
      %1442 = vmatpush.bf16.msra.mxu0 %v1397
      %1443 = vmatpush.bf16.msra.mxu0 %v1396
      %1444 = vmatpush.bf16.msra.mxu0 %v1395
      %1445 = vmatpush.bf16.msra.mxu0 %v1394
      %1446 = vmatpush.bf16.msra.mxu0 %v1393
      %1447 = vmatpush.bf16.msra.mxu0 %v1392
      %1448 = vmatmul.bf16.gmra.mxu0 %v1241
      %v1449 = vpop.f32.mrf.mxu0
      %v1450 = vadd.f32 %v1294, %v1449
      %v1451 = vpop.f32.mrf.mxu0
      %1452 = vdwg.mxu0
      %1453 = vmatpush.bf16.msra.mxu0 %v1407
      %1454 = vmatpush.bf16.msra.mxu0 %v1406
      %1455 = vmatpush.bf16.msra.mxu0 %v1405
      %1456 = vmatpush.bf16.msra.mxu0 %v1404
      %1457 = vmatpush.bf16.msra.mxu0 %v1403
      %1458 = vmatpush.bf16.msra.mxu0 %v1402
      %1459 = vmatpush.bf16.msra.mxu0 %v1401
      %1460 = vmatpush.bf16.msra.mxu0 %v1400
      %1461 = vmatmul.bf16.gmra.mxu0 %v1242
      %v1462 = vpop.f32.mrf.mxu0
      %v1463 = vadd.f32 %v1450, %v1462
      %v1464 = vpop.f32.mrf.mxu0
      %1465 = vdwg.mxu0
      %1466 = vmatpush.bf16.msra.mxu0 %v1415
      %1467 = vmatpush.bf16.msra.mxu0 %v1414
      %1468 = vmatpush.bf16.msra.mxu0 %v1413
      %1469 = vmatpush.bf16.msra.mxu0 %v1412
      %1470 = vmatpush.bf16.msra.mxu0 %v1411
      %1471 = vmatpush.bf16.msra.mxu0 %v1410
      %1472 = vmatpush.bf16.msra.mxu0 %v1409
      %1473 = vmatpush.bf16.msra.mxu0 %v1408
      %1474 = vmatmul.bf16.gmra.mxu0 %v1243
      %v1475 = vpop.f32.mrf.mxu0
      %v1476 = vadd.f32 %v1463, %v1475
      %v1477 = vpop.f32.mrf.mxu0
      %1478 = vdwg.mxu0
      %1479 = vst [vmem:[%s278] sm:$0xff] %v1476
      %p1480 = scmp.lt.s32.totalorder %s18, 1
      %s1481 = scalar_select %p1480, %s18, 1
      %s1482 = smul.addr %s1481, 8
      %s1483 = scalar_lea.vmem %s7, %s1482
      // Predicated region
      $region49: #{_lambda_.1} parent=47 // pred_check
        %p1484 = pneg %p188
      $region50: #{_lambda_.1} parent=47 // pred_check_branch
        %1486 = sbr.rel (%p1484) target = $region52
      $region51: #{_lambda_.1} parent=47 // pred_region
        _
      $region52: #{_lambda_.1} parent=47 // pred_fallthru
        _
    $region48: #{_lambda_.1} parent=5 // pred_fallthru
      _
    %p1487 = scmp.le.s32.totalorder 2, %s13
    // Predicated region
    $region53: #{_lambda_.1} parent=5 // pred_check
      %p1488 = pneg %p1487
    $region54: #{_lambda_.1} parent=5 // pred_check_branch
      %1490 = sbr.rel (%p1488) target = $region56
    $region55: #{_lambda_.1} parent=5 // pred_region
      %s1491 = ssub.s32 %s13, 2
      // Predicated region
      $region57: #{_lambda_.1} parent=55 // pred_check
        %p1492 = pneg %p194
      $region58: #{_lambda_.1} parent=55 // pred_check_branch
        %1494 = sbr.rel (%p1492) target = $region60
      $region59: #{_lambda_.1} parent=55 // pred_region
        %p1495 = scmp.lt.s32.totalorder %s19, 1
        %s1496 = scalar_select %p1495, %s19, 1
        %s1497 = smul.addr %s1496, 8
        %s1498 = scalar_lea.vmem %s7, %s1497
      $region60: #{_lambda_.1} parent=55 // pred_fallthru
        _
    $region56: #{_lambda_.1} parent=5 // pred_fallthru
      _
  $region6: #{_lambda_.1} parent=0 // loop_footer
    %s17 = sadd.s32 1, %s13
  $region7: #{_lambda_.1} parent=0 // loop_footer_branch
    %12 = sbr.rel target = $region3
  $region8: #{_lambda_.1} parent=0 // loop_exit
    _

</llo_original>
